<compile_context>
chip_gen: v7x
topology: tpu7x:2x2x1
jax: 0.10.0
libtpu: 0.0.40
codegen_flags: <defaults>
</compile_context>

<pallas_src>
import functools

import jax
import jax.numpy as jnp
from jax.experimental import pallas as pl
from jax.experimental.pallas import tpu as pltpu


# --------------------------------------------------------------------------
# Stage 1: w_h = x @ W   and   wh_a = w_h @ [a1 | a2]   (fused projections)
# --------------------------------------------------------------------------
def _project_kernel(x_ref, w_ref, a_ref, wh_ref, wha_ref):
    # bf16 MXU operands, f32 accumulation.
    w_h = jnp.dot(x_ref[...], w_ref[...], preferred_element_type=jnp.float32)
    # One (tn, F) x (F, 2) dot instead of two width-1 matvecs; logits stay f32
    # because they feed exp() downstream.
    wha_ref[...] = jnp.dot(w_h, a_ref[...], preferred_element_type=jnp.float32)
    # Store w_h in bf16 -> half the HBM traffic when stage 2 re-reads it.
    wh_ref[...] = w_h.astype(wh_ref.dtype)


# --------------------------------------------------------------------------
# Stage 2: streamed masked softmax (online / flash-style) + attention @ w_h
# --------------------------------------------------------------------------
def _attention_kernel(e1_ref, e2_ref, adj_ref, wh_ref, out_ref,
                      m_sc, l_sc, acc_sc, *, alpha, concat, wh_resident, tn):
    n_idx = pl.program_id(1)

    @pl.when(n_idx == 0)
    def _():
        m_sc[...] = jnp.full_like(m_sc[...], -jnp.inf)
        l_sc[...] = jnp.zeros_like(l_sc[...])
        acc_sc[...] = jnp.zeros_like(acc_sc[...])

    # adj streamed as bf16 (dominant HBM stream); mask / softmax math in f32.
    adj = adj_ref[...].astype(jnp.float32)               # (tr, tn)
    # e[r, n] = LeakyReLU( (w_h[:R] @ a1)[r] + (w_h @ a2)[n] )
    e = e1_ref[...] + e2_ref[...]                        # (tr,1)+(1,tn)->(tr,tn)
    e = jnp.maximum(e, alpha * e)                        # LeakyReLU (0<alpha<1)
    # _prepare_attentions: adj != 0 -> e * adj ; else -> -9e15 * 1
    logits = jnp.where(adj != 0.0, e * adj, jnp.float32(-9.0e15))

    # Online (flash-style) softmax accumulation over the gene tiles.
    m_prev = m_sc[...]
    m_new = jnp.maximum(m_prev, jnp.max(logits, axis=1, keepdims=True))
    corr = jnp.exp(m_prev - m_new)
    p = jnp.exp(logits - m_new)                          # (tr, tn) f32
    l_sc[...] = corr * l_sc[...] + jnp.sum(p, axis=1, keepdims=True)

    if wh_resident:
        # w_h lives fully in VMEM; slice the current gene tile out of it.
        start = pl.multiple_of(n_idx * tn, tn)
        wh_tile = wh_ref[pl.ds(start, tn), :]            # (tn, F) bf16
    else:
        wh_tile = wh_ref[...]                            # (tn, F) bf16 (streamed)
    acc_sc[...] = corr * acc_sc[...] + jnp.dot(
        p.astype(jnp.bfloat16), wh_tile,                 # bf16 MXU operands
        preferred_element_type=jnp.float32)              # f32 accumulation
    m_sc[...] = m_new

    # TODO(synk): dropout on the attention matrix is skipped (eval mode,
    # training=False => F.dropout is identity).

    @pl.when(n_idx == pl.num_programs(1) - 1)
    def _():
        res = acc_sc[...] * pl.reciprocal(l_sc[...], approx=True)
        if concat:
            res = jnp.where(res > 0.0, res, jnp.expm1(res))   # ELU(alpha=1)
        out_ref[...] = res.astype(out_ref.dtype)


# --------------------------------------------------------------------------
# Wrapper
# --------------------------------------------------------------------------
def _round_up(x, m):
    return ((x + m - 1) // m) * m


def _vmem_limit_bytes():
    """Generation-aware scoped VMEM budget (~3/4 of physical per-core VMEM)."""
    try:
        cap = int(pltpu.get_tpu_info().vmem_capacity_bytes)
        return max(32 * 1024 * 1024, min((cap * 3) // 4, 100 * 1024 * 1024))
    except Exception:
        return 32 * 1024 * 1024   # safe on v5e / v6e / v7x


def graph_attention_layer(x, weights, a_values, adj_mat, *, alpha=0.2,
                          concat=True, block_r=256, block_n=512,
                          adj_stream_dtype=jnp.bfloat16, core_parallel=False):
    n_genes, d_model = x.shape
    out_dim = weights.shape[1]
    n_regulons = adj_mat.shape[0]

    # bf16 MXU operands for x @ W (accumulation stays f32 inside the kernel).
    x = x.astype(jnp.bfloat16)
    weights = weights.astype(jnp.bfloat16)
    a_values = a_values.astype(jnp.float32)
    adj_mat = adj_mat.astype(jnp.float32)

    # ---- tile sizes & padding (lane dim multiple of 128, sublane of 8) ----
    tn = _round_up(min(block_n, _round_up(n_genes, 128)), 128)
    tr = _round_up(min(block_r, _round_up(n_regulons, 8)), 8)
    n_pad = _round_up(n_genes, tn)
    r_pad = _round_up(n_regulons, tr)

    if n_pad != n_genes:
        x = jnp.pad(x, ((0, n_pad - n_genes), (0, 0)))
        adj_mat = jnp.pad(adj_mat, ((0, 0), (0, n_pad - n_genes)))
        # TODO(synk): zero-padded gene columns only affect degenerate
        # all-zero-adjacency rows (reference maps those to a uniform softmax
        # over n_genes; the kernel would spread it over n_pad).
    if r_pad != n_regulons:
        adj_mat = jnp.pad(adj_mat, ((0, r_pad - n_regulons), (0, 0)))

    # Fuse a1 / a2 into a single (out_dim, 2) MXU operand.
    a_fused = jnp.concatenate(
        [a_values[:out_dim, :], a_values[out_dim:, :]], axis=1)

    vmem_limit = _vmem_limit_bytes()

    # -------------------- stage 1: projections --------------------
    stage1_bytes = (n_pad * d_model * 2 + d_model * out_dim * 2
                    + out_dim * 2 * 4 + n_pad * out_dim * 2 + n_pad * 2 * 4)
    w_h, wh_a = pl.pallas_call(
        _project_kernel,
        out_shape=(
            jax.ShapeDtypeStruct((n_pad, out_dim), jnp.bfloat16),
            jax.ShapeDtypeStruct((n_pad, 2), jnp.float32),
        ),
        grid=(n_pad // tn,),
        in_specs=[
            pl.BlockSpec((tn, d_model), lambda i: (i, 0)),
            pl.BlockSpec((d_model, out_dim), lambda i: (0, 0)),
            pl.BlockSpec((out_dim, 2), lambda i: (0, 0)),
        ],
        out_specs=(
            pl.BlockSpec((tn, out_dim), lambda i: (i, 0)),
            pl.BlockSpec((tn, 2), lambda i: (i, 0)),
        ),
        compiler_params=pltpu.CompilerParams(
            dimension_semantics=("parallel",),
            vmem_limit_bytes=vmem_limit),
        cost_estimate=pl.CostEstimate(
            flops=2 * n_pad * d_model * out_dim + 4 * n_pad * out_dim,
            transcendentals=0,
            bytes_accessed=stage1_bytes),
    )(x, weights, a_fused)

    # Regulon-side projection as an (R_pad, 1) column; gene-side projection as
    # a lane-major (1, N_pad) row (tiny relayouts OUTSIDE the hot kernel).
    e1 = wh_a[:n_regulons, 0:1]
    if r_pad != n_regulons:
        e1 = jnp.pad(e1, ((0, r_pad - n_regulons), (0, 0)))
    e2 = wh_a[:, 1:2].T                                   # (1, n_pad)

    # -------------------- stage 2: attention --------------------
    # NOTE: bf16 adjacency keeps the !=0 mask exact for normal magnitudes;
    # only the e*adj weighting is quantized.
    adj_stream = adj_mat.astype(adj_stream_dtype)
    adj_isize = jnp.dtype(adj_stream_dtype).itemsize

    # Keep w_h resident in VMEM across the whole grid when it fits the budget
    # (removes the per-R-tile w_h re-read); otherwise stream per N tile.
    resident_bytes = 2 * n_pad * out_dim * 2                       # 2 bufs, bf16
    streamed_per_step = (2 * (tr * tn * adj_isize + tr * 4 + tn * 4)
                         + 2 * tr * out_dim * 4)
    scratch_bytes = tr * out_dim * 4 + 2 * tr * 4
    wh_resident = (resident_bytes + streamed_per_step + scratch_bytes
                   <= (vmem_limit * 7) // 10)

    if wh_resident:
        wh_spec = pl.BlockSpec((n_pad, out_dim), lambda r, n: (0, 0))
        wh_read_bytes = n_pad * out_dim * 2
    else:
        wh_spec = pl.BlockSpec((tn, out_dim), lambda r, n: (n, 0))
        wh_read_bytes = (r_pad // tr) * n_pad * out_dim * 2

    if core_parallel:
        # TODO(synk): for v7x (2 TensorCores) — splits the R tiles across
        # cores. Default off: plain "parallel" is sufficient on v5e/v6e.
        dims = (pltpu.CORE_PARALLEL, pltpu.ARBITRARY)
    else:
        dims = ("parallel", "arbitrary")

    kernel = functools.partial(_attention_kernel, alpha=float(alpha),
                               concat=concat, wh_resident=wh_resident, tn=tn)
    out = pl.pallas_call(
        kernel,
        out_shape=jax.ShapeDtypeStruct((r_pad, out_dim), jnp.float32),
        grid=(r_pad // tr, n_pad // tn),                  # R parallel, N last
        in_specs=[
            pl.BlockSpec((tr, 1), lambda r, n: (r, 0)),       # e1 column
            pl.BlockSpec((1, tn), lambda r, n: (0, n)),       # e2 row (lane-major)
            pl.BlockSpec((tr, tn), lambda r, n: (r, n)),      # adj tile (bf16 stream)
            wh_spec,                                          # w_h (resident/streamed)
        ],
        out_specs=pl.BlockSpec((tr, out_dim), lambda r, n: (r, 0)),
        scratch_shapes=[
            pltpu.VMEM((tr, 1), jnp.float32),        # running max m
            pltpu.VMEM((tr, 1), jnp.float32),        # running denom l
            pltpu.VMEM((tr, out_dim), jnp.float32),  # running numerator acc
        ],
        compiler_params=pltpu.CompilerParams(
            dimension_semantics=dims,
            vmem_limit_bytes=vmem_limit),
        cost_estimate=pl.CostEstimate(
            flops=2 * r_pad * n_pad * out_dim + 8 * r_pad * n_pad,
            transcendentals=r_pad * n_pad + 2 * r_pad * (n_pad // tn),
            bytes_accessed=(r_pad * n_pad * adj_isize + wh_read_bytes
                            + r_pad * out_dim * 4 + r_pad * 4 + n_pad * 4)),
    )(e1, e2, adj_stream, w_h)

    return out[:n_regulons]


# --------------------------------------------------------------------------
# Helpers + self-test
# --------------------------------------------------------------------------
def _xavier_uniform(key, shape, gain):
    fan_in, fan_out = shape[0], shape[1]
    bound = gain * jnp.sqrt(6.0 / (fan_in + fan_out))
    return jax.random.uniform(key, shape, jnp.float32, -bound, bound)


def _reference(x, weights, a_values, adj_mat, *, alpha):
    """Pure-JAX f32 reference of the module forward (eval, concat=True)."""
    out_dim = weights.shape[1]
    r = adj_mat.shape[0]
    hp = jax.lax.Precision.HIGHEST
    w_h = jnp.dot(x, weights, precision=hp)
    wh1 = jnp.dot(w_h[:r], a_values[:out_dim], precision=hp)
    wh2 = jnp.dot(w_h, a_values[out_dim:], precision=hp)
    e = wh1 + wh2.T
    e = jnp.where(e >= 0.0, e, alpha * e)
    att = jnp.where(adj_mat != 0.0, e * adj_mat, jnp.float32(-9.0e15))
    att = jax.nn.softmax(att, axis=1)
    res = jnp.dot(att, w_h, precision=hp)
    return jnp.where(res > 0.0, res, jnp.expm1(res))


if __name__ == "__main__":
    # Small deterministic example: genes N = 1600, regulons R = 320,
    # d_model = 128, out_dim = 128.  Exercises padding (N->2048, R->512),
    # a multi-tile (2 x 4) stage-2 grid with tr=256 / tn=512, the online
    # softmax carry, and the resident-w_h path.
    N, R, D_MODEL, OUT_DIM = 1600, 320, 128, 128
    GAIN, ALPHA = 1.414, 0.2

    key = jax.random.PRNGKey(0)
    k_x, k_w, k_a, k_adj = jax.random.split(key, 4)

    x = jax.random.normal(k_x, (N, D_MODEL), jnp.float32)
    weights = _xavier_uniform(k_w, (D_MODEL, OUT_DIM), GAIN)
    a_values = _xavier_uniform(k_a, (2 * OUT_DIM, 1), GAIN)

    # sparse-ish weighted adjacency (regulons x genes)
    adj_raw = jax.random.uniform(k_adj, (R, N), jnp.float32)
    adj_mat = jnp.where(adj_raw > 0.5, adj_raw, 0.0)

    out = graph_attention_layer(x, weights, a_values, adj_mat, alpha=ALPHA)
    jax.block_until_ready(out)

    ref = _reference(x, weights, a_values, adj_mat, alpha=ALPHA)

    assert out.shape == (R, OUT_DIM)
    assert bool(jnp.all(jnp.isfinite(out)))
    # Loose-but-meaningful tolerance: bf16 MXU operands + bf16 adj stream.
    max_err = float(jnp.max(jnp.abs(out - ref)))
    assert jnp.allclose(out, ref, rtol=5e-2, atol=5e-2), max_err
    print("KERNEL_OK")
</pallas_src>

<mosaic_0001>
module attributes {stable_mosaic.version = 11 : i64} {
  func.func @_project_kernel(%arg0: i32, %arg1: memref<512x128xbf16, #tpu.memory_space<vmem>>, %arg2: memref<128x128xbf16, #tpu.memory_space<vmem>>, %arg3: memref<128x2xf32, #tpu.memory_space<vmem>>, %arg4: memref<512x128xbf16, #tpu.memory_space<vmem>>, %arg5: memref<512x2xf32, #tpu.memory_space<vmem>>) attributes {dimension_semantics = [#tpu.dimension_semantics<parallel>], iteration_bounds = array<i64: 4>, scalar_prefetch = 0 : i64, scratch_operands = 0 : i64, tpu.core_type = #tpu.core_type<tc>, window_params = [{transform_indices = @transform_0, window_bounds = array<i64: 512, 128>}, {pipeline_mode = #tpu.pipeline_mode<synchronous>, transform_indices = @transform_1, window_bounds = array<i64: 128, 128>}, {pipeline_mode = #tpu.pipeline_mode<synchronous>, transform_indices = @transform_2, window_bounds = array<i64: 128, 2>}, {transform_indices = @transform_3, window_bounds = array<i64: 512, 128>}, {transform_indices = @transform_4, window_bounds = array<i64: 512, 2>}]} {
    %c0 = arith.constant 0 : index
    %c0_0 = arith.constant 0 : index
    %0 = vector.load %arg1[%c0, %c0_0] : memref<512x128xbf16, #tpu.memory_space<vmem>>, vector<512x128xbf16>
    %c0_1 = arith.constant 0 : index
    %c0_2 = arith.constant 0 : index
    %1 = vector.load %arg2[%c0_1, %c0_2] : memref<128x128xbf16, #tpu.memory_space<vmem>>, vector<128x128xbf16>
    %cst = arith.constant dense<0.000000e+00> : vector<512x128xf32>
    %2 = tpu.matmul %0, %1, %cst {dimension_numbers = #tpu.dot_dimension_numbers<[1], [0], [0], [1], [0, 0, 1, 1], [], []>} : vector<512x128xbf16>, vector<128x128xbf16>, vector<512x128xf32> -> vector<512x128xf32>
    %c0_3 = arith.constant 0 : index
    %c0_4 = arith.constant 0 : index
    %3 = vector.load %arg3[%c0_3, %c0_4] : memref<128x2xf32, #tpu.memory_space<vmem>>, vector<128x2xf32>
    %cst_5 = arith.constant dense<0.000000e+00> : vector<512x2xf32>
    %4 = tpu.matmul %2, %3, %cst_5 {dimension_numbers = #tpu.dot_dimension_numbers<[1], [0], [0], [1], [0, 0, 1, 1], [], []>} : vector<512x128xf32>, vector<128x2xf32>, vector<512x2xf32> -> vector<512x2xf32>
    %c0_6 = arith.constant 0 : index
    %c0_7 = arith.constant 0 : index
    %5 = vector.load %arg5[%c0_6, %c0_7] : memref<512x2xf32, #tpu.memory_space<vmem>>, vector<512x2xf32>
    tpu.vector_store %arg5[%c0_6, %c0_7], %4 {strides = array<i32>} : memref<512x2xf32, #tpu.memory_space<vmem>>, vector<512x2xf32>,
    %6 = arith.truncf %2 : vector<512x128xf32> to vector<512x128xbf16>
    %c0_8 = arith.constant 0 : index
    %c0_9 = arith.constant 0 : index
    %7 = vector.load %arg4[%c0_8, %c0_9] : memref<512x128xbf16, #tpu.memory_space<vmem>>, vector<512x128xbf16>
    tpu.vector_store %arg4[%c0_8, %c0_9], %6 {strides = array<i32>} : memref<512x128xbf16, #tpu.memory_space<vmem>>, vector<512x128xbf16>,
    return
  }
  func.func @transform_0(%arg0: i32) -> (i32, i32) {
    %c0_i32 = arith.constant 0 : i32
    %c0_i32_0 = arith.constant 0 : i32
    return %arg0, %c0_i32 : i32, i32
  }
  func.func @transform_1(%arg0: i32) -> (i32, i32) {
    %c0_i32 = arith.constant 0 : i32
    %c0_i32_0 = arith.constant 0 : i32
    %c0_i32_1 = arith.constant 0 : i32
    return %c0_i32, %c0_i32_0 : i32, i32
  }
  func.func @transform_2(%arg0: i32) -> (i32, i32) {
    %c0_i32 = arith.constant 0 : i32
    %c0_i32_0 = arith.constant 0 : i32
    %c0_i32_1 = arith.constant 0 : i32
    return %c0_i32, %c0_i32_0 : i32, i32
  }
  func.func @transform_3(%arg0: i32) -> (i32, i32) {
    %c0_i32 = arith.constant 0 : i32
    %c0_i32_0 = arith.constant 0 : i32
    return %arg0, %c0_i32 : i32, i32
  }
  func.func @transform_4(%arg0: i32) -> (i32, i32) {
    %c0_i32 = arith.constant 0 : i32
    %c0_i32_0 = arith.constant 0 : i32
    return %arg0, %c0_i32 : i32, i32
  }
}

</mosaic_0001>

<llo_original>
// kernel: tpu_custom_call.1
$region0: #{tpu_custom_call.1}
  #allocation0 [shape = 'u32[]', space=smem, size = 0x4, offset = 0x4, fixed_abs, tag = 'smem constant byte address 0x4 - core index']
  #allocation1 [shape = 'u32[144,128]{1,0:T(1,128)}', space=vmem, size = 0x12000, scoped, tag = 'internal scratch']
  %s0 = inlined_call_operand.hbm [shape: bf16[2048,128], index: 0, kind: input, shape index: {}]
  %s1 = inlined_call_operand.vmem [shape: bf16[128,128], index: 1, kind: input, shape index: {}]
  %s2 = inlined_call_operand.vmem [shape: f32[128,2], index: 2, kind: input, shape index: {}]
  %s3 = inlined_call_operand.hbm [shape: bf16[2048,128], index: 3, kind: output, shape index: {0}]
  %s4 = inlined_call_operand.vmem [shape: f32[2048,2], index: 4, kind: output, shape index: {1}]
  %5 = xla_tuple %s3, %s4
  %s6 = sld [smem:[#allocation0]]
  $region57: #{tpu_custom_call.1} parent=0
    _
  %s8 = ssub.s32 1, %s6
  %s9 = scalar_select 0, %s8, %s6
  $region1: #{tpu_custom_call.1} parent=0
    #allocation2 [shape = 'u8[262144]{0}', space=vmem, size = 0x40000, scoped, tag = 'input window, operand 0']
    #allocation3 [shape = 's32[2]{0}', space=sflag, size = 0x8, scoped, tag = 'scoped memory for tpu_custom_call.1']
    #allocation4 [shape = 's32[2]{0}', space=sflag, size = 0x8, scoped, tag = 'scoped memory for tpu_custom_call.1']
    #allocation5 [shape = 'u8[262144]{0}', space=vmem, size = 0x40000, scoped, tag = 'output window, operand 0']
    %10 = vsyncpa [#allocation3], 0
    %s11 = scalar_lea.sflag [#allocation3], 1
    %12 = vsyncpa %s11, 0
    %13 = vsyncpa [#allocation4], 0
    %s14 = scalar_lea.sflag [#allocation4], 1
    %15 = vsyncpa %s14, 0
    loop: start=0, step=1, limit=6
    $region2: #{tpu_custom_call.1} parent=1 // loop_pre_header
      _
    $region3: #{tpu_custom_call.1} parent=1 // loop_header
      %s17 = sphi 0, %s21
      %p18 = scmp.ge.s32.totalorder %s17, 6
      %s27 = sphi 0, %s29
      %s30 = sphi 0, %s27
      %s31 = sphi 0, %s30
      %s47 = sphi 0, %s31
      %s51 = sphi 0, %s51
      %s53 = sphi 0, %s51
      %s54 = sphi 0, %s53
      %s68 = sphi 0, %s54
      %s72 = sphi 0, %s72
      %s74 = sphi 0, %s72
      %s75 = sphi 0, %s74
      %s89 = sphi 0, %s75
      %s95 = sphi 0, %s97
      %s98 = sphi 0, %s95
      %s99 = sphi 0, %s98
      %s115 = sphi 0, %s99
      %s121 = sphi 0, %s123
      %s124 = sphi 0, %s121
      %s125 = sphi 0, %s124
      %s141 = sphi 0, %s125
    $region4: #{tpu_custom_call.1} parent=1 // loop_header_branch
      %20 = sbr.rel (%p18) target = $region8
    $region5: #{tpu_custom_call.1} parent=1 // loop_body
      %s22 = ssub.s32 %s17, 1
      %s23 = ssub.s32 %s17, 2
      %s24 = sadd.s32 %s17, 1
      %s25 = ssub.s32 %s17, %s24
      %p26 = scmp.eq.s32.totalorder %s25, 0
      %s28 = sadd.s32 %s27, 1
      %s29 = scalar_select %p26, %s27, %s28
      %p32 = pneg %p26
      %p33 = scmp.eq.s32.totalorder %s17, 3
      %p34 = por %p32, %p33
      %p35 = scmp.ne.s32.totalorder %s27, %s30
      %p36 = scmp.eq.s32.totalorder %s17, 0
      %p37 = por %p35, %p36
      %p38 = scmp.ne.s32.totalorder %s27, %s30
      %p39 = scmp.eq.s32.totalorder %s22, 3
      %p40 = por %p38, %p39
      %p41 = scmp.ne.s32.totalorder %s30, %s31
      %p42 = scmp.eq.s32.totalorder %s22, 0
      %p43 = por %p41, %p42
      %p44 = scmp.ne.s32.totalorder %s30, %s31
      %p45 = scmp.eq.s32.totalorder %s23, 3
      %p46 = por %p44, %p45
      %p48 = scmp.ne.s32.totalorder %s31, %s47
      %p49 = scmp.eq.s32.totalorder %s23, 0
      %p50 = por %p48, %p49
      %s52 = sadd.s32 %s51, 1
      %p55 = scmp.eq.s32.totalorder %s17, 3
      %p56 = scmp.ne.s32.totalorder %s51, %s53
      %p57 = scmp.eq.s32.totalorder %s17, 0
      %p58 = por %p56, %p57
      %p59 = scmp.ne.s32.totalorder %s51, %s53
      %p60 = scmp.eq.s32.totalorder %s22, 3
      %p61 = por %p59, %p60
      %p62 = scmp.ne.s32.totalorder %s53, %s54
      %p63 = scmp.eq.s32.totalorder %s22, 0
      %p64 = por %p62, %p63
      %p65 = scmp.ne.s32.totalorder %s53, %s54
      %p66 = scmp.eq.s32.totalorder %s23, 3
      %p67 = por %p65, %p66
      %p69 = scmp.ne.s32.totalorder %s54, %s68
      %p70 = scmp.eq.s32.totalorder %s23, 0
      %p71 = por %p69, %p70
      %s73 = sadd.s32 %s72, 1
      %p76 = scmp.eq.s32.totalorder %s17, 3
      %p77 = scmp.ne.s32.totalorder %s72, %s74
      %p78 = scmp.eq.s32.totalorder %s17, 0
      %p79 = por %p77, %p78
      %p80 = scmp.ne.s32.totalorder %s72, %s74
      %p81 = scmp.eq.s32.totalorder %s22, 3
      %p82 = por %p80, %p81
      %p83 = scmp.ne.s32.totalorder %s74, %s75
      %p84 = scmp.eq.s32.totalorder %s22, 0
      %p85 = por %p83, %p84
      %p86 = scmp.ne.s32.totalorder %s74, %s75
      %p87 = scmp.eq.s32.totalorder %s23, 3
      %p88 = por %p86, %p87
      %p90 = scmp.ne.s32.totalorder %s75, %s89
      %p91 = scmp.eq.s32.totalorder %s23, 0
      %p92 = por %p90, %p91
      %s93 = ssub.s32 %s17, %s24
      %p94 = scmp.eq.s32.totalorder %s93, 0
      %s96 = sadd.s32 %s95, 1
      %s97 = scalar_select %p94, %s95, %s96
      %p100 = pneg %p94
      %p101 = scmp.eq.s32.totalorder %s17, 3
      %p102 = por %p100, %p101
      %p103 = scmp.ne.s32.totalorder %s95, %s98
      %p104 = scmp.eq.s32.totalorder %s17, 0
      %p105 = por %p103, %p104
      %p106 = scmp.ne.s32.totalorder %s95, %s98
      %p107 = scmp.eq.s32.totalorder %s22, 3
      %p108 = por %p106, %p107
      %p109 = scmp.ne.s32.totalorder %s98, %s99
      %p110 = scmp.eq.s32.totalorder %s22, 0
      %p111 = por %p109, %p110
      %p112 = scmp.ne.s32.totalorder %s98, %s99
      %p113 = scmp.eq.s32.totalorder %s23, 3
      %p114 = por %p112, %p113
      %p116 = scmp.ne.s32.totalorder %s99, %s115
      %p117 = scmp.eq.s32.totalorder %s23, 0
      %p118 = por %p116, %p117
      %s119 = ssub.s32 %s17, %s24
      %p120 = scmp.eq.s32.totalorder %s119, 0
      %s122 = sadd.s32 %s121, 1
      %s123 = scalar_select %p120, %s121, %s122
      %p126 = pneg %p120
      %p127 = scmp.eq.s32.totalorder %s17, 3
      %p128 = por %p126, %p127
      %p129 = scmp.ne.s32.totalorder %s121, %s124
      %p130 = scmp.eq.s32.totalorder %s17, 0
      %p131 = por %p129, %p130
      %p132 = scmp.ne.s32.totalorder %s121, %s124
      %p133 = scmp.eq.s32.totalorder %s22, 3
      %p134 = por %p132, %p133
      %p135 = scmp.ne.s32.totalorder %s124, %s125
      %p136 = scmp.eq.s32.totalorder %s22, 0
      %p137 = por %p135, %p136
      %p138 = scmp.ne.s32.totalorder %s124, %s125
      %p139 = scmp.eq.s32.totalorder %s23, 3
      %p140 = por %p138, %p139
      %p142 = scmp.ne.s32.totalorder %s125, %s141
      %p143 = scmp.eq.s32.totalorder %s23, 0
      %p144 = por %p142, %p143
      %p145 = scmp.le.s32.totalorder 1, %s17
      %p146 = scmp.lt.s32.totalorder %s17, 5
      %p147 = pnand %p145, %p146
      %p148 = pneg %p147
      // Predicated region
      $region9: #{tpu_custom_call.1} parent=5 // pred_check
        _
      $region10: #{tpu_custom_call.1} parent=5 // pred_check_branch
        %150 = sbr.rel (%p147) target = $region12
      $region11: #{tpu_custom_call.1} parent=5 // pred_region
        %s151 = ssub.s32 %s17, 1
        // Predicated region
        $region13: #{tpu_custom_call.1} parent=11 // pred_check
          %p152 = pneg %p64
        $region14: #{tpu_custom_call.1} parent=11 // pred_check_branch
          %154 = sbr.rel (%p152) target = $region16
        $region15: #{tpu_custom_call.1} parent=11 // pred_region
          _
        $region16: #{tpu_custom_call.1} parent=11 // pred_fallthru
          _
        // Predicated region
        $region17: #{tpu_custom_call.1} parent=11 // pred_check
          %p155 = pneg %p85
        $region18: #{tpu_custom_call.1} parent=11 // pred_check_branch
          %157 = sbr.rel (%p155) target = $region20
        $region19: #{tpu_custom_call.1} parent=11 // pred_region
          _
        $region20: #{tpu_custom_call.1} parent=11 // pred_fallthru
          _
      $region12: #{tpu_custom_call.1} parent=5 // pred_fallthru
        _
      %p158 = scmp.lt.s32.totalorder %s17, 4
      // Predicated region
      $region21: #{tpu_custom_call.1} parent=5 // pred_check
        %p159 = pneg %p158
      $region22: #{tpu_custom_call.1} parent=5 // pred_check_branch
        %161 = sbr.rel (%p159) target = $region24
      $region23: #{tpu_custom_call.1} parent=5 // pred_region
        // Predicated region
        $region25: #{tpu_custom_call.1} parent=23 // pred_check
          %p162 = pneg %p37
        $region26: #{tpu_custom_call.1} parent=23 // pred_check_branch
          %164 = sbr.rel (%p162) target = $region28
        $region27: #{tpu_custom_call.1} parent=23 // pred_region
          %s165 = sand.u32 %s27, 1
          %s166 = scalar_lea.sflag [#allocation3], %s165
          %s167 = sand.u32 %s27, 1
          %s168 = smul.addr %s167, 256
          %s169 = scalar_lea.vmem [#allocation2], %s168
          %s170 = smul.u32 64, %s17
          %s172 = ssub.s32 4096, 4096
          %173 = vsyncadd %s166, %s172
          %s174 = smul.addr %s170, 64
          %s175 = scalar_lea.hbm %s0, %s174
          %s176 = sshll.u32 %s169, 4
          %s177 = int_to_ptr.vmem [resolvable:$true] %s176
          %182 = dma.hbm_to_vmem [thread:$0]  %s175, 4096, %s177, %s166, 64, 64, 4
        $region28: #{tpu_custom_call.1} parent=23 // pred_fallthru
          _
      $region24: #{tpu_custom_call.1} parent=5 // pred_fallthru
        _
      %p183 = scmp.le.s32.totalorder 1, %s17
      %p184 = scmp.lt.s32.totalorder %s17, 5
      %p185 = pnand %p183, %p184
      %p186 = pneg %p185
      // Predicated region
      $region29: #{tpu_custom_call.1} parent=5 // pred_check
        _
      $region30: #{tpu_custom_call.1} parent=5 // pred_check_branch
        %188 = sbr.rel (%p185) target = $region32
      $region31: #{tpu_custom_call.1} parent=5 // pred_region
        %s189 = ssub.s32 %s17, 1
        %s190 = sand.u32 %s30, 1
        %s191 = scalar_lea.sflag [#allocation3], %s190
        %s192 = sand.u32 %s30, 1
        %s193 = smul.addr %s192, 256
        %s194 = scalar_lea.vmem [#allocation2], %s193
        // Predicated region
        $region33: #{tpu_custom_call.1} parent=31 // pred_check
          %p195 = pneg %p43
        $region34: #{tpu_custom_call.1} parent=31 // pred_check_branch
          %197 = sbr.rel (%p195) target = $region36
        $region35: #{tpu_custom_call.1} parent=31 // pred_region
          %198 = dma.done %s191, 4096
        $region36: #{tpu_custom_call.1} parent=31 // pred_fallthru
          _
        %s199 = sand.u32 %s30, 1
        %s200 = scalar_lea.sflag [#allocation3], %s199
        %s201 = sand.u32 %s30, 1
        %s202 = smul.addr %s201, 256
        %s203 = scalar_lea.vmem [#allocation2], %s202
        %p204 = pneg %p43
        %p205 = pneg %p40
        %p206 = pneg %p64
        %p207 = pneg %p61
        %p208 = pneg %p85
        %p209 = pneg %p82
        %p210 = pneg %p111
        %p211 = pneg %p108
        %s212 = sand.u32 %s98, 1
        %s213 = scalar_lea.sflag [#allocation4], %s212
        %s214 = sand.u32 %s98, 1
        %s215 = smul.addr %s214, 256
        %s216 = scalar_lea.vmem [#allocation5], %s215
        %p217 = pneg %p137
        %p218 = pneg %p134
        %s219 = smul.u32 64, %s22
        %p220 = scmp.lt.s32.totalorder %s219, 255
        %s221 = scalar_select %p220, %s219, 255
        %s222 = smul.addr %s221, 8
        %s223 = scalar_lea.vmem %s4, %s222
        %s224 = smul.u32 64, %s22
        %s225 = smul.u32 64, %s22
        %s226 = smul.u32 64, %s22
        %p227 = scmp.lt.s32.totalorder %s226, 255
        %s228 = scalar_select %p227, %s226, 255
        %s229 = smul.addr %s228, 8
        %s230 = scalar_lea.vmem %s4, %s229
        %s231 = smul.u32 64, %s22
        %v233 = vld [vmem:[%s194] sm:$0xf]
        %v234 = vld [vmem:[%s194 + $0x4] sm:$0xf]
        %v235 = vld [vmem:[%s194 + $0x8] sm:$0xf]
        %v236 = vld [vmem:[%s194 + $0xc] sm:$0xf]
        %v237 = vld [vmem:[%s194 + $0x10] sm:$0xf]
        %v238 = vld [vmem:[%s194 + $0x14] sm:$0xf]
        %v239 = vld [vmem:[%s194 + $0x18] sm:$0xf]
        %v240 = vld [vmem:[%s194 + $0x1c] sm:$0xf]
        %v241 = vld [vmem:[%s194 + $0x20] sm:$0xf]
        %v242 = vld [vmem:[%s194 + $0x24] sm:$0xf]
        %v243 = vld [vmem:[%s194 + $0x28] sm:$0xf]
        %v244 = vld [vmem:[%s194 + $0x2c] sm:$0xf]
        %v245 = vld [vmem:[%s194 + $0x30] sm:$0xf]
        %v246 = vld [vmem:[%s194 + $0x34] sm:$0xf]
        %v247 = vld [vmem:[%s194 + $0x38] sm:$0xf]
        %v248 = vld [vmem:[%s194 + $0x3c] sm:$0xf]
        %v249 = vld [vmem:[%s194 + $0x40] sm:$0xf]
        %v250 = vld [vmem:[%s194 + $0x44] sm:$0xf]
        %v251 = vld [vmem:[%s194 + $0x48] sm:$0xf]
        %v252 = vld [vmem:[%s194 + $0x4c] sm:$0xf]
        %v253 = vld [vmem:[%s194 + $0x50] sm:$0xf]
        %v254 = vld [vmem:[%s194 + $0x54] sm:$0xf]
        %v255 = vld [vmem:[%s194 + $0x58] sm:$0xf]
        %v256 = vld [vmem:[%s194 + $0x5c] sm:$0xf]
        %v257 = vld [vmem:[%s194 + $0x60] sm:$0xf]
        %v258 = vld [vmem:[%s194 + $0x64] sm:$0xf]
        %v259 = vld [vmem:[%s194 + $0x68] sm:$0xf]
        %v260 = vld [vmem:[%s194 + $0x6c] sm:$0xf]
        %v261 = vld [vmem:[%s194 + $0x70] sm:$0xf]
        %v262 = vld [vmem:[%s194 + $0x74] sm:$0xf]
        %v263 = vld [vmem:[%s194 + $0x78] sm:$0xf]
        %v264 = vld [vmem:[%s194 + $0x7c] sm:$0xf]
        %v265 = vld [vmem:[%s194 + $0x80] sm:$0xf]
        %v266 = vld [vmem:[%s194 + $0x84] sm:$0xf]
        %v267 = vld [vmem:[%s194 + $0x88] sm:$0xf]
        %v268 = vld [vmem:[%s194 + $0x8c] sm:$0xf]
        %v269 = vld [vmem:[%s194 + $0x90] sm:$0xf]
        %v270 = vld [vmem:[%s194 + $0x94] sm:$0xf]
        %v271 = vld [vmem:[%s194 + $0x98] sm:$0xf]
        %v272 = vld [vmem:[%s194 + $0x9c] sm:$0xf]
        %v273 = vld [vmem:[%s194 + $0xa0] sm:$0xf]
        %v274 = vld [vmem:[%s194 + $0xa4] sm:$0xf]
        %v275 = vld [vmem:[%s194 + $0xa8] sm:$0xf]
        %v276 = vld [vmem:[%s194 + $0xac] sm:$0xf]
        %v277 = vld [vmem:[%s194 + $0xb0] sm:$0xf]
        %v278 = vld [vmem:[%s194 + $0xb4] sm:$0xf]
        %v279 = vld [vmem:[%s194 + $0xb8] sm:$0xf]
        %v280 = vld [vmem:[%s194 + $0xbc] sm:$0xf]
        %v281 = vld [vmem:[%s194 + $0xc0] sm:$0xf]
        %v282 = vld [vmem:[%s194 + $0xc4] sm:$0xf]
        %v283 = vld [vmem:[%s194 + $0xc8] sm:$0xf]
        %v284 = vld [vmem:[%s194 + $0xcc] sm:$0xf]
        %v285 = vld [vmem:[%s194 + $0xd0] sm:$0xf]
        %v286 = vld [vmem:[%s194 + $0xd4] sm:$0xf]
        %v287 = vld [vmem:[%s194 + $0xd8] sm:$0xf]
        %v288 = vld [vmem:[%s194 + $0xdc] sm:$0xf]
        %v289 = vld [vmem:[%s194 + $0xe0] sm:$0xf]
        %v290 = vld [vmem:[%s194 + $0xe4] sm:$0xf]
        %v291 = vld [vmem:[%s194 + $0xe8] sm:$0xf]
        %v292 = vld [vmem:[%s194 + $0xec] sm:$0xf]
        %v293 = vld [vmem:[%s194 + $0xf0] sm:$0xf]
        %v294 = vld [vmem:[%s194 + $0xf4] sm:$0xf]
        %v295 = vld [vmem:[%s194 + $0xf8] sm:$0xf]
        %v296 = vld [vmem:[%s194 + $0xfc] sm:$0xf]
        %v297 = vld [vmem:[%s1] sm:$0xf]
        %v298 = vld [vmem:[%s1 + $0x4] sm:$0xf]
        %v299 = vld [vmem:[%s1 + $0x8] sm:$0xf]
        %v300 = vld [vmem:[%s1 + $0xc] sm:$0xf]
        %v301 = vld [vmem:[%s1 + $0x10] sm:$0xf]
        %v302 = vld [vmem:[%s1 + $0x14] sm:$0xf]
        %v303 = vld [vmem:[%s1 + $0x18] sm:$0xf]
        %v304 = vld [vmem:[%s1 + $0x1c] sm:$0xf]
        %v305 = vld [vmem:[%s1 + $0x20] sm:$0xf]
        %v306 = vld [vmem:[%s1 + $0x24] sm:$0xf]
        %v307 = vld [vmem:[%s1 + $0x28] sm:$0xf]
        %v308 = vld [vmem:[%s1 + $0x2c] sm:$0xf]
        %v309 = vld [vmem:[%s1 + $0x30] sm:$0xf]
        %v310 = vld [vmem:[%s1 + $0x34] sm:$0xf]
        %v311 = vld [vmem:[%s1 + $0x38] sm:$0xf]
        %v312 = vld [vmem:[%s1 + $0x3c] sm:$0xf]
        %v377 = vunpack.c.l.b16 %v233
        %v378 = vunpack.c.l.b16 %v234
        %v379 = vunpack.c.l.b16 %v235
        %v380 = vunpack.c.l.b16 %v236
        %v381 = vunpack.c.l.b16 %v237
        %v382 = vunpack.c.l.b16 %v238
        %v383 = vunpack.c.l.b16 %v239
        %v384 = vunpack.c.l.b16 %v240
        %v385 = vunpack.c.l.b16 %v241
        %v386 = vunpack.c.l.b16 %v242
        %v387 = vunpack.c.l.b16 %v243
        %v388 = vunpack.c.l.b16 %v244
        %v389 = vunpack.c.l.b16 %v245
        %v390 = vunpack.c.l.b16 %v246
        %v391 = vunpack.c.l.b16 %v247
        %v392 = vunpack.c.l.b16 %v248
        %v393 = vunpack.c.l.b16 %v249
        %v394 = vunpack.c.l.b16 %v250
        %v395 = vunpack.c.l.b16 %v251
        %v396 = vunpack.c.l.b16 %v252
        %v397 = vunpack.c.l.b16 %v253
        %v398 = vunpack.c.l.b16 %v254
        %v399 = vunpack.c.l.b16 %v255
        %v400 = vunpack.c.l.b16 %v256
        %v401 = vunpack.c.l.b16 %v257
        %v402 = vunpack.c.l.b16 %v258
        %v403 = vunpack.c.l.b16 %v259
        %v404 = vunpack.c.l.b16 %v260
        %v405 = vunpack.c.l.b16 %v261
        %v406 = vunpack.c.l.b16 %v262
        %v407 = vunpack.c.l.b16 %v263
        %v408 = vunpack.c.l.b16 %v264
        %v409 = vunpack.c.l.b16 %v265
        %v410 = vunpack.c.l.b16 %v266
        %v411 = vunpack.c.l.b16 %v267
        %v412 = vunpack.c.l.b16 %v268
        %v413 = vunpack.c.l.b16 %v269
        %v414 = vunpack.c.l.b16 %v270
        %v415 = vunpack.c.l.b16 %v271
        %v416 = vunpack.c.l.b16 %v272
        %v417 = vunpack.c.l.b16 %v273
        %v418 = vunpack.c.l.b16 %v274
        %v419 = vunpack.c.l.b16 %v275
        %v420 = vunpack.c.l.b16 %v276
        %v421 = vunpack.c.l.b16 %v277
        %v422 = vunpack.c.l.b16 %v278
        %v423 = vunpack.c.l.b16 %v279
        %v424 = vunpack.c.l.b16 %v280
        %v425 = vunpack.c.l.b16 %v281
        %v426 = vunpack.c.l.b16 %v282
        %v427 = vunpack.c.l.b16 %v283
        %v428 = vunpack.c.l.b16 %v284
        %v429 = vunpack.c.l.b16 %v285
        %v430 = vunpack.c.l.b16 %v286
        %v431 = vunpack.c.l.b16 %v287
        %v432 = vunpack.c.l.b16 %v288
        %v433 = vunpack.c.l.b16 %v289
        %v434 = vunpack.c.l.b16 %v290
        %v435 = vunpack.c.l.b16 %v291
        %v436 = vunpack.c.l.b16 %v292
        %v437 = vunpack.c.l.b16 %v293
        %v438 = vunpack.c.l.b16 %v294
        %v439 = vunpack.c.l.b16 %v295
        %v440 = vunpack.c.l.b16 %v296
        %v441 = vpack.c.b16 %v378, %v377
        %v442 = vpack.c.b16 %v380, %v379
        %v443 = vpack.c.b16 %v382, %v381
        %v444 = vpack.c.b16 %v384, %v383
        %v445 = vpack.c.b16 %v386, %v385
        %v446 = vpack.c.b16 %v388, %v387
        %v447 = vpack.c.b16 %v390, %v389
        %v448 = vpack.c.b16 %v392, %v391
        %v449 = vpack.c.b16 %v394, %v393
        %v450 = vpack.c.b16 %v396, %v395
        %v451 = vpack.c.b16 %v398, %v397
        %v452 = vpack.c.b16 %v400, %v399
        %v453 = vpack.c.b16 %v402, %v401
        %v454 = vpack.c.b16 %v404, %v403
        %v455 = vpack.c.b16 %v406, %v405
        %v456 = vpack.c.b16 %v408, %v407
        %v457 = vpack.c.b16 %v410, %v409
        %v458 = vpack.c.b16 %v412, %v411
        %v459 = vpack.c.b16 %v414, %v413
        %v460 = vpack.c.b16 %v416, %v415
        %v461 = vpack.c.b16 %v418, %v417
        %v462 = vpack.c.b16 %v420, %v419
        %v463 = vpack.c.b16 %v422, %v421
        %v464 = vpack.c.b16 %v424, %v423
        %v465 = vpack.c.b16 %v426, %v425
        %v466 = vpack.c.b16 %v428, %v427
        %v467 = vpack.c.b16 %v430, %v429
        %v468 = vpack.c.b16 %v432, %v431
        %v469 = vpack.c.b16 %v434, %v433
        %v470 = vpack.c.b16 %v436, %v435
        %v471 = vpack.c.b16 %v438, %v437
        %v472 = vpack.c.b16 %v440, %v439
        %v521 = vunpack.c.l.b16 %v297
        %v522 = vunpack.c.l.b16 %v298
        %v523 = vunpack.c.l.b16 %v299
        %v524 = vunpack.c.l.b16 %v300
        %v525 = vunpack.c.l.b16 %v301
        %v526 = vunpack.c.l.b16 %v302
        %v527 = vunpack.c.l.b16 %v303
        %v528 = vunpack.c.l.b16 %v304
        %v529 = vunpack.c.l.b16 %v305
        %v530 = vunpack.c.l.b16 %v306
        %v531 = vunpack.c.l.b16 %v307
        %v532 = vunpack.c.l.b16 %v308
        %v533 = vunpack.c.l.b16 %v309
        %v534 = vunpack.c.l.b16 %v310
        %v535 = vunpack.c.l.b16 %v311
        %v536 = vunpack.c.l.b16 %v312
        %v537 = vpack.c.b16 %v522, %v521
        %v538 = vpack.c.b16 %v524, %v523
        %v539 = vpack.c.b16 %v526, %v525
        %v540 = vpack.c.b16 %v528, %v527
        %v541 = vpack.c.b16 %v530, %v529
        %v542 = vpack.c.b16 %v532, %v531
        %v543 = vpack.c.b16 %v534, %v533
        %v544 = vpack.c.b16 %v536, %v535
        %553 = vmatprep.subr.bf16.mxu0 0
        %554 = vmatpush1.bf16.msra.mxu0 %v537
        %555 = vmatprep.subr.bf16.mxu0 0
        %556 = vmatpush1.bf16.msra.mxu0 %v538
        %557 = vmatprep.subr.bf16.mxu0 0
        %558 = vmatpush1.bf16.msra.mxu0 %v539
        %559 = vmatprep.subr.bf16.mxu0 0
        %560 = vmatpush1.bf16.msra.mxu0 %v540
        %561 = vmatprep.subr.bf16.mxu0 0
        %562 = vmatpush1.bf16.msra.mxu0 %v541
        %563 = vmatprep.subr.bf16.mxu0 0
        %564 = vmatpush1.bf16.msra.mxu0 %v542
        %565 = vmatprep.subr.bf16.mxu0 0
        %566 = vmatpush1.bf16.msra.mxu0 %v543
        %567 = vmatprep.subr.bf16.mxu0 0
        %568 = vmatpush1.bf16.msra.mxu0 %v544
        %569 = vmatprep.subr.bf16.mxu0 0
        %570 = vmatpush1.bf16.msra.mxu0 0
        %571 = vmatprep.subr.bf16.mxu0 0
        %572 = vmatpush1.bf16.msra.mxu0 0
        %573 = vmatprep.subr.bf16.mxu0 0
        %574 = vmatpush1.bf16.msra.mxu0 0
        %575 = vmatprep.subr.bf16.mxu0 0
        %576 = vmatpush1.bf16.msra.mxu0 0
        %577 = vmatprep.subr.bf16.mxu0 0
        %578 = vmatpush1.bf16.msra.mxu0 0
        %579 = vmatprep.subr.bf16.mxu0 0
        %580 = vmatpush1.bf16.msra.mxu0 0
        %581 = vmatprep.subr.bf16.mxu0 0
        %582 = vmatpush1.bf16.msra.mxu0 0
        %583 = vmatprep.subr.bf16.mxu0 0
        %584 = vmatpush1.bf16.msra.mxu0 0
        %585 = vmatprep.mubr.bf16.mxu0 0
        %586 = vmatmul.mubr.bf16.gmra.mrb[0].mxu0 %v441
        %v587 = vpop.f32.mrb[0].mxu0
        %v588 = vadd.f32 0.0, %v587
        %v589 = vpop.f32.mrb[0].mxu0
        %v590 = vpop.f32.mrb[0].mxu0
        %v591 = vadd.f32 0.0, %v590
        %v592 = vpop.f32.mrb[0].mxu0
        %593 = vmatprep.mubr.bf16.mxu0 0
        %594 = vmatmul.mubr.bf16.gmra.mrb[0].mxu0 %v442
        %v595 = vpop.f32.mrb[0].mxu0
        %v596 = vadd.f32 0.0, %v595
        %v597 = vpop.f32.mrb[0].mxu0
        %v598 = vpop.f32.mrb[0].mxu0
        %v599 = vadd.f32 0.0, %v598
        %v600 = vpop.f32.mrb[0].mxu0
        %601 = vmatprep.mubr.bf16.mxu0 0
        %602 = vmatmul.mubr.bf16.gmra.mrb[0].mxu0 %v443
        %v603 = vpop.f32.mrb[0].mxu0
        %v604 = vadd.f32 0.0, %v603
        %v605 = vpop.f32.mrb[0].mxu0
        %v606 = vpop.f32.mrb[0].mxu0
        %v607 = vadd.f32 0.0, %v606
        %v608 = vpop.f32.mrb[0].mxu0
        %609 = vmatprep.mubr.bf16.mxu0 0
        %610 = vmatmul.mubr.bf16.gmra.mrb[0].mxu0 %v444
        %v611 = vpop.f32.mrb[0].mxu0
        %v612 = vadd.f32 0.0, %v611
        %v613 = vpop.f32.mrb[0].mxu0
        %v614 = vpop.f32.mrb[0].mxu0
        %v615 = vadd.f32 0.0, %v614
        %v616 = vpop.f32.mrb[0].mxu0
        %617 = vmatprep.mubr.bf16.mxu0 0
        %618 = vmatmul.mubr.bf16.gmra.mrb[0].mxu0 %v445
        %v619 = vpop.f32.mrb[0].mxu0
        %v620 = vadd.f32 0.0, %v619
        %v621 = vpop.f32.mrb[0].mxu0
        %v622 = vpop.f32.mrb[0].mxu0
        %v623 = vadd.f32 0.0, %v622
        %v624 = vpop.f32.mrb[0].mxu0
        %625 = vmatprep.mubr.bf16.mxu0 0
        %626 = vmatmul.mubr.bf16.gmra.mrb[0].mxu0 %v446
        %v627 = vpop.f32.mrb[0].mxu0
        %v628 = vadd.f32 0.0, %v627
        %v629 = vpop.f32.mrb[0].mxu0
        %v630 = vpop.f32.mrb[0].mxu0
        %v631 = vadd.f32 0.0, %v630
        %v632 = vpop.f32.mrb[0].mxu0
        %633 = vmatprep.mubr.bf16.mxu0 0
        %634 = vmatmul.mubr.bf16.gmra.mrb[0].mxu0 %v447
        %v635 = vpop.f32.mrb[0].mxu0
        %v636 = vadd.f32 0.0, %v635
        %v637 = vpop.f32.mrb[0].mxu0
        %v638 = vpop.f32.mrb[0].mxu0
        %v639 = vadd.f32 0.0, %v638
        %v640 = vpop.f32.mrb[0].mxu0
        %641 = vmatprep.mubr.bf16.mxu0 0
        %642 = vmatmul.mubr.bf16.gmra.mrb[0].mxu0 %v448
        %v643 = vpop.f32.mrb[0].mxu0
        %v644 = vadd.f32 0.0, %v643
        %v645 = vpop.f32.mrb[0].mxu0
        %v646 = vpop.f32.mrb[0].mxu0
        %v647 = vadd.f32 0.0, %v646
        %v648 = vpop.f32.mrb[0].mxu0
        %649 = vmatprep.mubr.bf16.mxu0 0
        %650 = vmatmul.mubr.bf16.gmra.mrb[0].mxu0 %v449
        %v651 = vpop.f32.mrb[0].mxu0
        %v652 = vadd.f32 0.0, %v651
        %v653 = vpop.f32.mrb[0].mxu0
        %v654 = vpop.f32.mrb[0].mxu0
        %v655 = vadd.f32 0.0, %v654
        %v656 = vpop.f32.mrb[0].mxu0
        %657 = vmatprep.mubr.bf16.mxu0 0
        %658 = vmatmul.mubr.bf16.gmra.mrb[0].mxu0 %v450
        %v659 = vpop.f32.mrb[0].mxu0
        %v660 = vadd.f32 0.0, %v659
        %v661 = vpop.f32.mrb[0].mxu0
        %v662 = vpop.f32.mrb[0].mxu0
        %v663 = vadd.f32 0.0, %v662
        %v664 = vpop.f32.mrb[0].mxu0
        %665 = vmatprep.mubr.bf16.mxu0 0
        %666 = vmatmul.mubr.bf16.gmra.mrb[0].mxu0 %v451
        %v667 = vpop.f32.mrb[0].mxu0
        %v668 = vadd.f32 0.0, %v667
        %v669 = vpop.f32.mrb[0].mxu0
        %v670 = vpop.f32.mrb[0].mxu0
        %v671 = vadd.f32 0.0, %v670
        %v672 = vpop.f32.mrb[0].mxu0
        %673 = vmatprep.mubr.bf16.mxu0 0
        %674 = vmatmul.mubr.bf16.gmra.mrb[0].mxu0 %v452
        %v675 = vpop.f32.mrb[0].mxu0
        %v676 = vadd.f32 0.0, %v675
        %v677 = vpop.f32.mrb[0].mxu0
        %v678 = vpop.f32.mrb[0].mxu0
        %v679 = vadd.f32 0.0, %v678
        %v680 = vpop.f32.mrb[0].mxu0
        %681 = vmatprep.mubr.bf16.mxu0 0
        %682 = vmatmul.mubr.bf16.gmra.mrb[0].mxu0 %v453
        %v683 = vpop.f32.mrb[0].mxu0
        %v684 = vadd.f32 0.0, %v683
        %v685 = vpop.f32.mrb[0].mxu0
        %v686 = vpop.f32.mrb[0].mxu0
        %v687 = vadd.f32 0.0, %v686
        %v688 = vpop.f32.mrb[0].mxu0
        %689 = vmatprep.mubr.bf16.mxu0 0
        %690 = vmatmul.mubr.bf16.gmra.mrb[0].mxu0 %v454
        %v691 = vpop.f32.mrb[0].mxu0
        %v692 = vadd.f32 0.0, %v691
        %v693 = vpop.f32.mrb[0].mxu0
        %v694 = vpop.f32.mrb[0].mxu0
        %v695 = vadd.f32 0.0, %v694
        %v696 = vpop.f32.mrb[0].mxu0
        %697 = vmatprep.mubr.bf16.mxu0 0
        %698 = vmatmul.mubr.bf16.gmra.mrb[0].mxu0 %v455
        %v699 = vpop.f32.mrb[0].mxu0
        %v700 = vadd.f32 0.0, %v699
        %v701 = vpop.f32.mrb[0].mxu0
        %v702 = vpop.f32.mrb[0].mxu0
        %v703 = vadd.f32 0.0, %v702
        %v704 = vpop.f32.mrb[0].mxu0
        %705 = vmatprep.mubr.bf16.mxu0 0
        %706 = vmatmul.mubr.bf16.gmra.mrb[0].mxu0 %v456
        %v707 = vpop.f32.mrb[0].mxu0
        %v708 = vadd.f32 0.0, %v707
        %v709 = vpop.f32.mrb[0].mxu0
        %v710 = vpop.f32.mrb[0].mxu0
        %v711 = vadd.f32 0.0, %v710
        %v712 = vpop.f32.mrb[0].mxu0
        %713 = vmatprep.mubr.bf16.mxu0 0
        %714 = vmatmul.mubr.bf16.gmra.mrb[0].mxu0 %v457
        %v715 = vpop.f32.mrb[0].mxu0
        %v716 = vadd.f32 0.0, %v715
        %v717 = vpop.f32.mrb[0].mxu0
        %v718 = vpop.f32.mrb[0].mxu0
        %v719 = vadd.f32 0.0, %v718
        %v720 = vpop.f32.mrb[0].mxu0
        %721 = vmatprep.mubr.bf16.mxu0 0
        %722 = vmatmul.mubr.bf16.gmra.mrb[0].mxu0 %v458
        %v723 = vpop.f32.mrb[0].mxu0
        %v724 = vadd.f32 0.0, %v723
        %v725 = vpop.f32.mrb[0].mxu0
        %v726 = vpop.f32.mrb[0].mxu0
        %v727 = vadd.f32 0.0, %v726
        %v728 = vpop.f32.mrb[0].mxu0
        %729 = vmatprep.mubr.bf16.mxu0 0
        %730 = vmatmul.mubr.bf16.gmra.mrb[0].mxu0 %v459
        %v731 = vpop.f32.mrb[0].mxu0
        %v732 = vadd.f32 0.0, %v731
        %v733 = vpop.f32.mrb[0].mxu0
        %v734 = vpop.f32.mrb[0].mxu0
        %v735 = vadd.f32 0.0, %v734
        %v736 = vpop.f32.mrb[0].mxu0
        %737 = vmatprep.mubr.bf16.mxu0 0
        %738 = vmatmul.mubr.bf16.gmra.mrb[0].mxu0 %v460
        %v739 = vpop.f32.mrb[0].mxu0
        %v740 = vadd.f32 0.0, %v739
        %v741 = vpop.f32.mrb[0].mxu0
        %v742 = vpop.f32.mrb[0].mxu0
        %v743 = vadd.f32 0.0, %v742
        %v744 = vpop.f32.mrb[0].mxu0
        %745 = vmatprep.mubr.bf16.mxu0 0
        %746 = vmatmul.mubr.bf16.gmra.mrb[0].mxu0 %v461
        %v747 = vpop.f32.mrb[0].mxu0
        %v748 = vadd.f32 0.0, %v747
        %v749 = vpop.f32.mrb[0].mxu0
        %v750 = vpop.f32.mrb[0].mxu0
        %v751 = vadd.f32 0.0, %v750
        %v752 = vpop.f32.mrb[0].mxu0
        %753 = vmatprep.mubr.bf16.mxu0 0
        %754 = vmatmul.mubr.bf16.gmra.mrb[0].mxu0 %v462
        %v755 = vpop.f32.mrb[0].mxu0
        %v756 = vadd.f32 0.0, %v755
        %v757 = vpop.f32.mrb[0].mxu0
        %v758 = vpop.f32.mrb[0].mxu0
        %v759 = vadd.f32 0.0, %v758
        %v760 = vpop.f32.mrb[0].mxu0
        %761 = vmatprep.mubr.bf16.mxu0 0
        %762 = vmatmul.mubr.bf16.gmra.mrb[0].mxu0 %v463
        %v763 = vpop.f32.mrb[0].mxu0
        %v764 = vadd.f32 0.0, %v763
        %v765 = vpop.f32.mrb[0].mxu0
        %v766 = vpop.f32.mrb[0].mxu0
        %v767 = vadd.f32 0.0, %v766
        %v768 = vpop.f32.mrb[0].mxu0
        %769 = vmatprep.mubr.bf16.mxu0 0
        %770 = vmatmul.mubr.bf16.gmra.mrb[0].mxu0 %v464
        %v771 = vpop.f32.mrb[0].mxu0
        %v772 = vadd.f32 0.0, %v771
        %v773 = vpop.f32.mrb[0].mxu0
        %v774 = vpop.f32.mrb[0].mxu0
        %v775 = vadd.f32 0.0, %v774
        %v776 = vpop.f32.mrb[0].mxu0
        %777 = vmatprep.mubr.bf16.mxu0 0
        %778 = vmatmul.mubr.bf16.gmra.mrb[0].mxu0 %v465
        %v779 = vpop.f32.mrb[0].mxu0
        %v780 = vadd.f32 0.0, %v779
        %v781 = vpop.f32.mrb[0].mxu0
        %v782 = vpop.f32.mrb[0].mxu0
        %v783 = vadd.f32 0.0, %v782
        %v784 = vpop.f32.mrb[0].mxu0
        %785 = vmatprep.mubr.bf16.mxu0 0
        %786 = vmatmul.mubr.bf16.gmra.mrb[0].mxu0 %v466
        %v787 = vpop.f32.mrb[0].mxu0
        %v788 = vadd.f32 0.0, %v787
        %v789 = vpop.f32.mrb[0].mxu0
        %v790 = vpop.f32.mrb[0].mxu0
        %v791 = vadd.f32 0.0, %v790
        %v792 = vpop.f32.mrb[0].mxu0
        %793 = vmatprep.mubr.bf16.mxu0 0
        %794 = vmatmul.mubr.bf16.gmra.mrb[0].mxu0 %v467
        %v795 = vpop.f32.mrb[0].mxu0
        %v796 = vadd.f32 0.0, %v795
        %v797 = vpop.f32.mrb[0].mxu0
        %v798 = vpop.f32.mrb[0].mxu0
        %v799 = vadd.f32 0.0, %v798
        %v800 = vpop.f32.mrb[0].mxu0
        %801 = vmatprep.mubr.bf16.mxu0 0
        %802 = vmatmul.mubr.bf16.gmra.mrb[0].mxu0 %v468
        %v803 = vpop.f32.mrb[0].mxu0
        %v804 = vadd.f32 0.0, %v803
        %v805 = vpop.f32.mrb[0].mxu0
        %v806 = vpop.f32.mrb[0].mxu0
        %v807 = vadd.f32 0.0, %v806
        %v808 = vpop.f32.mrb[0].mxu0
        %809 = vmatprep.mubr.bf16.mxu0 0
        %810 = vmatmul.mubr.bf16.gmra.mrb[0].mxu0 %v469
        %v811 = vpop.f32.mrb[0].mxu0
        %v812 = vadd.f32 0.0, %v811
        %v813 = vpop.f32.mrb[0].mxu0
        %v814 = vpop.f32.mrb[0].mxu0
        %v815 = vadd.f32 0.0, %v814
        %v816 = vpop.f32.mrb[0].mxu0
        %817 = vmatprep.mubr.bf16.mxu0 0
        %818 = vmatmul.mubr.bf16.gmra.mrb[0].mxu0 %v470
        %v819 = vpop.f32.mrb[0].mxu0
        %v820 = vadd.f32 0.0, %v819
        %v821 = vpop.f32.mrb[0].mxu0
        %v822 = vpop.f32.mrb[0].mxu0
        %v823 = vadd.f32 0.0, %v822
        %v824 = vpop.f32.mrb[0].mxu0
        %825 = vmatprep.mubr.bf16.mxu0 0
        %826 = vmatmul.mubr.bf16.gmra.mrb[0].mxu0 %v471
        %v827 = vpop.f32.mrb[0].mxu0
        %v828 = vadd.f32 0.0, %v827
        %v829 = vpop.f32.mrb[0].mxu0
        %v830 = vpop.f32.mrb[0].mxu0
        %v831 = vadd.f32 0.0, %v830
        %v832 = vpop.f32.mrb[0].mxu0
        %833 = vmatprep.mubr.bf16.mxu0 0
        %834 = vmatmul.mubr.bf16.gmra.mrb[0].mxu0 %v472
        %v835 = vpop.f32.mrb[0].mxu0
        %v836 = vadd.f32 0.0, %v835
        %v837 = vpop.f32.mrb[0].mxu0
        %v838 = vpop.f32.mrb[0].mxu0
        %v839 = vadd.f32 0.0, %v838
        %v840 = vpop.f32.mrb[0].mxu0
        %841 = vdwg.mxu0
        %v842 = vld [vmem:[%s2] sm:$0xff]
        %v843 = vld [vmem:[%s2 + $0x8] sm:$0xff]
        %v844 = vld [vmem:[%s2 + $0x10] sm:$0xff]
        %v845 = vld [vmem:[%s2 + $0x18] sm:$0xff]
        %v846 = vld [vmem:[%s2 + $0x20] sm:$0xff]
        %v847 = vld [vmem:[%s2 + $0x28] sm:$0xff]
        %v848 = vld [vmem:[%s2 + $0x30] sm:$0xff]
        %v849 = vld [vmem:[%s2 + $0x38] sm:$0xff]
        %v850 = vld [vmem:[%s2 + $0x40] sm:$0xff]
        %v851 = vld [vmem:[%s2 + $0x48] sm:$0xff]
        %v852 = vld [vmem:[%s2 + $0x50] sm:$0xff]
        %v853 = vld [vmem:[%s2 + $0x58] sm:$0xff]
        %v854 = vld [vmem:[%s2 + $0x60] sm:$0xff]
        %v855 = vld [vmem:[%s2 + $0x68] sm:$0xff]
        %v856 = vld [vmem:[%s2 + $0x70] sm:$0xff]
        %v857 = vld [vmem:[%s2 + $0x78] sm:$0xff]
        %858 = vmatprep.subr.mxu0 0.0
        %859 = vmatpush1.msra.mxu0 %v842
        %860 = vmatprep.subr.mxu0 0.0
        %861 = vmatpush1.msra.mxu0 %v843
        %862 = vmatprep.subr.mxu0 0.0
        %863 = vmatpush1.msra.mxu0 %v844
        %864 = vmatprep.subr.mxu0 0.0
        %865 = vmatpush1.msra.mxu0 %v845
        %866 = vmatprep.subr.mxu0 0.0
        %867 = vmatpush1.msra.mxu0 %v846
        %868 = vmatprep.subr.mxu0 0.0
        %869 = vmatpush1.msra.mxu0 %v847
        %870 = vmatprep.subr.mxu0 0.0
        %871 = vmatpush1.msra.mxu0 %v848
        %872 = vmatprep.subr.mxu0 0.0
        %873 = vmatpush1.msra.mxu0 %v849
        %874 = vmatprep.subr.mxu0 0.0
        %875 = vmatpush1.msra.mxu0 %v850
        %876 = vmatprep.subr.mxu0 0.0
        %877 = vmatpush1.msra.mxu0 %v851
        %878 = vmatprep.subr.mxu0 0.0
        %879 = vmatpush1.msra.mxu0 %v852
        %880 = vmatprep.subr.mxu0 0.0
        %881 = vmatpush1.msra.mxu0 %v853
        %882 = vmatprep.subr.mxu0 0.0
        %883 = vmatpush1.msra.mxu0 %v854
        %884 = vmatprep.subr.mxu0 0.0
        %885 = vmatpush1.msra.mxu0 %v855
        %886 = vmatprep.subr.mxu0 0.0
        %887 = vmatpush1.msra.mxu0 %v856
        %888 = vmatprep.subr.mxu0 0.0
        %889 = vmatpush1.msra.mxu0 %v857
        %890 = vmatprep.subr.mxu0 0.0
        %891 = vmatpush1.msra.mxu0 0.0
        %892 = vmatprep.subr.mxu0 0.0
        %893 = vmatpush1.msra.mxu0 0.0
        %894 = vmatprep.subr.mxu0 0.0
        %895 = vmatpush1.msra.mxu0 0.0
        %896 = vmatprep.subr.mxu0 0.0
        %897 = vmatpush1.msra.mxu0 0.0
        %898 = vmatprep.subr.mxu0 0.0
        %899 = vmatpush1.msra.mxu0 0.0
        %900 = vmatprep.subr.mxu0 0.0
        %901 = vmatpush1.msra.mxu0 0.0
        %902 = vmatprep.subr.mxu0 0.0
        %903 = vmatpush1.msra.mxu0 0.0
        %904 = vmatprep.subr.mxu0 0.0
        %905 = vmatpush1.msra.mxu0 0.0
        %906 = vmatprep.subr.mxu0 0.0
        %907 = vmatpush1.msra.mxu0 0.0
        %908 = vmatprep.subr.mxu0 0.0
        %909 = vmatpush1.msra.mxu0 0.0
        %910 = vmatprep.subr.mxu0 0.0
        %911 = vmatpush1.msra.mxu0 0.0
        %912 = vmatprep.subr.mxu0 0.0
        %913 = vmatpush1.msra.mxu0 0.0
        %914 = vmatprep.subr.mxu0 0.0
        %915 = vmatpush1.msra.mxu0 0.0
        %916 = vmatprep.subr.mxu0 0.0
        %917 = vmatpush1.msra.mxu0 0.0
        %918 = vmatprep.subr.mxu0 0.0
        %919 = vmatpush1.msra.mxu0 0.0
        %920 = vmatprep.subr.mxu0 0.0
        %921 = vmatpush1.msra.mxu0 0.0
        %922 = vmatprep.mubr.f32.mxu0 0.0
        %923 = vmatmul.mubr.f32.gmra.mrb[0].mxu0 %v588
        %v924 = vpop.f32.mrb[0].mxu0
        %v925 = vadd.f32 0.0, %v924
        %v926 = vpop.f32.mrb[0].mxu0
        %927 = vmatprep.mubr.f32.mxu0 0.0
        %928 = vmatmul.mubr.f32.gmra.mrb[0].mxu0 %v591
        %v929 = vpop.f32.mrb[0].mxu0
        %v930 = vadd.f32 0.0, %v929
        %v931 = vpop.f32.mrb[0].mxu0
        %932 = vmatprep.mubr.f32.mxu0 0.0
        %933 = vmatmul.mubr.f32.gmra.mrb[0].mxu0 %v596
        %v934 = vpop.f32.mrb[0].mxu0
        %v935 = vadd.f32 0.0, %v934
        %v936 = vpop.f32.mrb[0].mxu0
        %937 = vmatprep.mubr.f32.mxu0 0.0
        %938 = vmatmul.mubr.f32.gmra.mrb[0].mxu0 %v599
        %v939 = vpop.f32.mrb[0].mxu0
        %v940 = vadd.f32 0.0, %v939
        %v941 = vpop.f32.mrb[0].mxu0
        %942 = vmatprep.mubr.f32.mxu0 0.0
        %943 = vmatmul.mubr.f32.gmra.mrb[0].mxu0 %v604
        %v944 = vpop.f32.mrb[0].mxu0
        %v945 = vadd.f32 0.0, %v944
        %v946 = vpop.f32.mrb[0].mxu0
        %947 = vmatprep.mubr.f32.mxu0 0.0
        %948 = vmatmul.mubr.f32.gmra.mrb[0].mxu0 %v607
        %v949 = vpop.f32.mrb[0].mxu0
        %v950 = vadd.f32 0.0, %v949
        %v951 = vpop.f32.mrb[0].mxu0
        %952 = vmatprep.mubr.f32.mxu0 0.0
        %953 = vmatmul.mubr.f32.gmra.mrb[0].mxu0 %v612
        %v954 = vpop.f32.mrb[0].mxu0
        %v955 = vadd.f32 0.0, %v954
        %v956 = vpop.f32.mrb[0].mxu0
        %957 = vmatprep.mubr.f32.mxu0 0.0
        %958 = vmatmul.mubr.f32.gmra.mrb[0].mxu0 %v615
        %v959 = vpop.f32.mrb[0].mxu0
        %v960 = vadd.f32 0.0, %v959
        %v961 = vpop.f32.mrb[0].mxu0
        %962 = vmatprep.mubr.f32.mxu0 0.0
        %963 = vmatmul.mubr.f32.gmra.mrb[0].mxu0 %v620
        %v964 = vpop.f32.mrb[0].mxu0
        %v965 = vadd.f32 0.0, %v964
        %v966 = vpop.f32.mrb[0].mxu0
        %967 = vmatprep.mubr.f32.mxu0 0.0
        %968 = vmatmul.mubr.f32.gmra.mrb[0].mxu0 %v623
        %v969 = vpop.f32.mrb[0].mxu0
        %v970 = vadd.f32 0.0, %v969
        %v971 = vpop.f32.mrb[0].mxu0
        %972 = vmatprep.mubr.f32.mxu0 0.0
        %973 = vmatmul.mubr.f32.gmra.mrb[0].mxu0 %v628
        %v974 = vpop.f32.mrb[0].mxu0
        %v975 = vadd.f32 0.0, %v974
        %v976 = vpop.f32.mrb[0].mxu0
        %977 = vmatprep.mubr.f32.mxu0 0.0
        %978 = vmatmul.mubr.f32.gmra.mrb[0].mxu0 %v631
        %v979 = vpop.f32.mrb[0].mxu0
        %v980 = vadd.f32 0.0, %v979
        %v981 = vpop.f32.mrb[0].mxu0
        %982 = vmatprep.mubr.f32.mxu0 0.0
        %983 = vmatmul.mubr.f32.gmra.mrb[0].mxu0 %v636
        %v984 = vpop.f32.mrb[0].mxu0
        %v985 = vadd.f32 0.0, %v984
        %v986 = vpop.f32.mrb[0].mxu0
        %987 = vmatprep.mubr.f32.mxu0 0.0
        %988 = vmatmul.mubr.f32.gmra.mrb[0].mxu0 %v639
        %v989 = vpop.f32.mrb[0].mxu0
        %v990 = vadd.f32 0.0, %v989
        %v991 = vpop.f32.mrb[0].mxu0
        %992 = vmatprep.mubr.f32.mxu0 0.0
        %993 = vmatmul.mubr.f32.gmra.mrb[0].mxu0 %v644
        %v994 = vpop.f32.mrb[0].mxu0
        %v995 = vadd.f32 0.0, %v994
        %v996 = vpop.f32.mrb[0].mxu0
        %997 = vmatprep.mubr.f32.mxu0 0.0
        %998 = vmatmul.mubr.f32.gmra.mrb[0].mxu0 %v647
        %v999 = vpop.f32.mrb[0].mxu0
        %v1000 = vadd.f32 0.0, %v999
        %v1001 = vpop.f32.mrb[0].mxu0
        %1002 = vmatprep.mubr.f32.mxu0 0.0
        %1003 = vmatmul.mubr.f32.gmra.mrb[0].mxu0 %v652
        %v1004 = vpop.f32.mrb[0].mxu0
        %v1005 = vadd.f32 0.0, %v1004
        %v1006 = vpop.f32.mrb[0].mxu0
        %1007 = vmatprep.mubr.f32.mxu0 0.0
        %1008 = vmatmul.mubr.f32.gmra.mrb[0].mxu0 %v655
        %v1009 = vpop.f32.mrb[0].mxu0
        %v1010 = vadd.f32 0.0, %v1009
        %v1011 = vpop.f32.mrb[0].mxu0
        %1012 = vmatprep.mubr.f32.mxu0 0.0
        %1013 = vmatmul.mubr.f32.gmra.mrb[0].mxu0 %v660
        %v1014 = vpop.f32.mrb[0].mxu0
        %v1015 = vadd.f32 0.0, %v1014
        %v1016 = vpop.f32.mrb[0].mxu0
        %1017 = vmatprep.mubr.f32.mxu0 0.0
        %1018 = vmatmul.mubr.f32.gmra.mrb[0].mxu0 %v663
        %v1019 = vpop.f32.mrb[0].mxu0
        %v1020 = vadd.f32 0.0, %v1019
        %v1021 = vpop.f32.mrb[0].mxu0
        %1022 = vmatprep.mubr.f32.mxu0 0.0
        %1023 = vmatmul.mubr.f32.gmra.mrb[0].mxu0 %v668
        %v1024 = vpop.f32.mrb[0].mxu0
        %v1025 = vadd.f32 0.0, %v1024
        %v1026 = vpop.f32.mrb[0].mxu0
        %1027 = vmatprep.mubr.f32.mxu0 0.0
        %1028 = vmatmul.mubr.f32.gmra.mrb[0].mxu0 %v671
        %v1029 = vpop.f32.mrb[0].mxu0
        %v1030 = vadd.f32 0.0, %v1029
        %v1031 = vpop.f32.mrb[0].mxu0
        %1032 = vmatprep.mubr.f32.mxu0 0.0
        %1033 = vmatmul.mubr.f32.gmra.mrb[0].mxu0 %v676
        %v1034 = vpop.f32.mrb[0].mxu0
        %v1035 = vadd.f32 0.0, %v1034
        %v1036 = vpop.f32.mrb[0].mxu0
        %1037 = vmatprep.mubr.f32.mxu0 0.0
        %1038 = vmatmul.mubr.f32.gmra.mrb[0].mxu0 %v679
        %v1039 = vpop.f32.mrb[0].mxu0
        %v1040 = vadd.f32 0.0, %v1039
        %v1041 = vpop.f32.mrb[0].mxu0
        %1042 = vmatprep.mubr.f32.mxu0 0.0
        %1043 = vmatmul.mubr.f32.gmra.mrb[0].mxu0 %v684
        %v1044 = vpop.f32.mrb[0].mxu0
        %v1045 = vadd.f32 0.0, %v1044
        %v1046 = vpop.f32.mrb[0].mxu0
        %1047 = vmatprep.mubr.f32.mxu0 0.0
        %1048 = vmatmul.mubr.f32.gmra.mrb[0].mxu0 %v687
        %v1049 = vpop.f32.mrb[0].mxu0
        %v1050 = vadd.f32 0.0, %v1049
        %v1051 = vpop.f32.mrb[0].mxu0
        %1052 = vmatprep.mubr.f32.mxu0 0.0
        %1053 = vmatmul.mubr.f32.gmra.mrb[0].mxu0 %v692
        %v1054 = vpop.f32.mrb[0].mxu0
        %v1055 = vadd.f32 0.0, %v1054
        %v1056 = vpop.f32.mrb[0].mxu0
        %1057 = vmatprep.mubr.f32.mxu0 0.0
        %1058 = vmatmul.mubr.f32.gmra.mrb[0].mxu0 %v695
        %v1059 = vpop.f32.mrb[0].mxu0
        %v1060 = vadd.f32 0.0, %v1059
        %v1061 = vpop.f32.mrb[0].mxu0
        %1062 = vmatprep.mubr.f32.mxu0 0.0
        %1063 = vmatmul.mubr.f32.gmra.mrb[0].mxu0 %v700
        %v1064 = vpop.f32.mrb[0].mxu0
        %v1065 = vadd.f32 0.0, %v1064
        %v1066 = vpop.f32.mrb[0].mxu0
        %1067 = vmatprep.mubr.f32.mxu0 0.0
        %1068 = vmatmul.mubr.f32.gmra.mrb[0].mxu0 %v703
        %v1069 = vpop.f32.mrb[0].mxu0
        %v1070 = vadd.f32 0.0, %v1069
        %v1071 = vpop.f32.mrb[0].mxu0
        %1072 = vmatprep.mubr.f32.mxu0 0.0
        %1073 = vmatmul.mubr.f32.gmra.mrb[0].mxu0 %v708
        %v1074 = vpop.f32.mrb[0].mxu0
        %v1075 = vadd.f32 0.0, %v1074
        %v1076 = vpop.f32.mrb[0].mxu0
        %1077 = vmatprep.mubr.f32.mxu0 0.0
        %1078 = vmatmul.mubr.f32.gmra.mrb[0].mxu0 %v711
        %v1079 = vpop.f32.mrb[0].mxu0
        %v1080 = vadd.f32 0.0, %v1079
        %v1081 = vpop.f32.mrb[0].mxu0
        %1082 = vmatprep.mubr.f32.mxu0 0.0
        %1083 = vmatmul.mubr.f32.gmra.mrb[0].mxu0 %v716
        %v1084 = vpop.f32.mrb[0].mxu0
        %v1085 = vadd.f32 0.0, %v1084
        %v1086 = vpop.f32.mrb[0].mxu0
        %1087 = vmatprep.mubr.f32.mxu0 0.0
        %1088 = vmatmul.mubr.f32.gmra.mrb[0].mxu0 %v719
        %v1089 = vpop.f32.mrb[0].mxu0
        %v1090 = vadd.f32 0.0, %v1089
        %v1091 = vpop.f32.mrb[0].mxu0
        %1092 = vmatprep.mubr.f32.mxu0 0.0
        %1093 = vmatmul.mubr.f32.gmra.mrb[0].mxu0 %v724
        %v1094 = vpop.f32.mrb[0].mxu0
        %v1095 = vadd.f32 0.0, %v1094
        %v1096 = vpop.f32.mrb[0].mxu0
        %1097 = vmatprep.mubr.f32.mxu0 0.0
        %1098 = vmatmul.mubr.f32.gmra.mrb[0].mxu0 %v727
        %v1099 = vpop.f32.mrb[0].mxu0
        %v1100 = vadd.f32 0.0, %v1099
        %v1101 = vpop.f32.mrb[0].mxu0
        %1102 = vmatprep.mubr.f32.mxu0 0.0
        %1103 = vmatmul.mubr.f32.gmra.mrb[0].mxu0 %v732
        %v1104 = vpop.f32.mrb[0].mxu0
        %v1105 = vadd.f32 0.0, %v1104
        %v1106 = vpop.f32.mrb[0].mxu0
        %1107 = vmatprep.mubr.f32.mxu0 0.0
        %1108 = vmatmul.mubr.f32.gmra.mrb[0].mxu0 %v735
        %v1109 = vpop.f32.mrb[0].mxu0
        %v1110 = vadd.f32 0.0, %v1109
        %v1111 = vpop.f32.mrb[0].mxu0
        %1112 = vmatprep.mubr.f32.mxu0 0.0
        %1113 = vmatmul.mubr.f32.gmra.mrb[0].mxu0 %v740
        %v1114 = vpop.f32.mrb[0].mxu0
        %v1115 = vadd.f32 0.0, %v1114
        %v1116 = vpop.f32.mrb[0].mxu0
        %1117 = vmatprep.mubr.f32.mxu0 0.0
        %1118 = vmatmul.mubr.f32.gmra.mrb[0].mxu0 %v743
        %v1119 = vpop.f32.mrb[0].mxu0
        %v1120 = vadd.f32 0.0, %v1119
        %v1121 = vpop.f32.mrb[0].mxu0
        %1122 = vmatprep.mubr.f32.mxu0 0.0
        %1123 = vmatmul.mubr.f32.gmra.mrb[0].mxu0 %v748
        %v1124 = vpop.f32.mrb[0].mxu0
        %v1125 = vadd.f32 0.0, %v1124
        %v1126 = vpop.f32.mrb[0].mxu0
        %1127 = vmatprep.mubr.f32.mxu0 0.0
        %1128 = vmatmul.mubr.f32.gmra.mrb[0].mxu0 %v751
        %v1129 = vpop.f32.mrb[0].mxu0
        %v1130 = vadd.f32 0.0, %v1129
        %v1131 = vpop.f32.mrb[0].mxu0
        %1132 = vmatprep.mubr.f32.mxu0 0.0
        %1133 = vmatmul.mubr.f32.gmra.mrb[0].mxu0 %v756
        %v1134 = vpop.f32.mrb[0].mxu0
        %v1135 = vadd.f32 0.0, %v1134
        %v1136 = vpop.f32.mrb[0].mxu0
        %1137 = vmatprep.mubr.f32.mxu0 0.0
        %1138 = vmatmul.mubr.f32.gmra.mrb[0].mxu0 %v759
        %v1139 = vpop.f32.mrb[0].mxu0
        %v1140 = vadd.f32 0.0, %v1139
        %v1141 = vpop.f32.mrb[0].mxu0
        %1142 = vmatprep.mubr.f32.mxu0 0.0
        %1143 = vmatmul.mubr.f32.gmra.mrb[0].mxu0 %v764
        %v1144 = vpop.f32.mrb[0].mxu0
        %v1145 = vadd.f32 0.0, %v1144
        %v1146 = vpop.f32.mrb[0].mxu0
        %1147 = vmatprep.mubr.f32.mxu0 0.0
        %1148 = vmatmul.mubr.f32.gmra.mrb[0].mxu0 %v767
        %v1149 = vpop.f32.mrb[0].mxu0
        %v1150 = vadd.f32 0.0, %v1149
        %v1151 = vpop.f32.mrb[0].mxu0
        %1152 = vmatprep.mubr.f32.mxu0 0.0
        %1153 = vmatmul.mubr.f32.gmra.mrb[0].mxu0 %v772
        %v1154 = vpop.f32.mrb[0].mxu0
        %v1155 = vadd.f32 0.0, %v1154
        %v1156 = vpop.f32.mrb[0].mxu0
        %1157 = vmatprep.mubr.f32.mxu0 0.0
        %1158 = vmatmul.mubr.f32.gmra.mrb[0].mxu0 %v775
        %v1159 = vpop.f32.mrb[0].mxu0
        %v1160 = vadd.f32 0.0, %v1159
        %v1161 = vpop.f32.mrb[0].mxu0
        %1162 = vmatprep.mubr.f32.mxu0 0.0
        %1163 = vmatmul.mubr.f32.gmra.mrb[0].mxu0 %v780
        %v1164 = vpop.f32.mrb[0].mxu0
        %v1165 = vadd.f32 0.0, %v1164
        %v1166 = vpop.f32.mrb[0].mxu0
        %1167 = vmatprep.mubr.f32.mxu0 0.0
        %1168 = vmatmul.mubr.f32.gmra.mrb[0].mxu0 %v783
        %v1169 = vpop.f32.mrb[0].mxu0
        %v1170 = vadd.f32 0.0, %v1169
        %v1171 = vpop.f32.mrb[0].mxu0
        %1172 = vmatprep.mubr.f32.mxu0 0.0
        %1173 = vmatmul.mubr.f32.gmra.mrb[0].mxu0 %v788
        %v1174 = vpop.f32.mrb[0].mxu0
        %v1175 = vadd.f32 0.0, %v1174
        %v1176 = vpop.f32.mrb[0].mxu0
        %1177 = vmatprep.mubr.f32.mxu0 0.0
        %1178 = vmatmul.mubr.f32.gmra.mrb[0].mxu0 %v791
        %v1179 = vpop.f32.mrb[0].mxu0
        %v1180 = vadd.f32 0.0, %v1179
        %v1181 = vpop.f32.mrb[0].mxu0
        %1182 = vmatprep.mubr.f32.mxu0 0.0
        %1183 = vmatmul.mubr.f32.gmra.mrb[0].mxu0 %v796
        %v1184 = vpop.f32.mrb[0].mxu0
        %v1185 = vadd.f32 0.0, %v1184
        %v1186 = vpop.f32.mrb[0].mxu0
        %1187 = vmatprep.mubr.f32.mxu0 0.0
        %1188 = vmatmul.mubr.f32.gmra.mrb[0].mxu0 %v799
        %v1189 = vpop.f32.mrb[0].mxu0
        %v1190 = vadd.f32 0.0, %v1189
        %v1191 = vpop.f32.mrb[0].mxu0
        %1192 = vmatprep.mubr.f32.mxu0 0.0
        %1193 = vmatmul.mubr.f32.gmra.mrb[0].mxu0 %v804
        %v1194 = vpop.f32.mrb[0].mxu0
        %v1195 = vadd.f32 0.0, %v1194
        %v1196 = vpop.f32.mrb[0].mxu0
        %1197 = vmatprep.mubr.f32.mxu0 0.0
        %1198 = vmatmul.mubr.f32.gmra.mrb[0].mxu0 %v807
        %v1199 = vpop.f32.mrb[0].mxu0
        %v1200 = vadd.f32 0.0, %v1199
        %v1201 = vpop.f32.mrb[0].mxu0
        %1202 = vmatprep.mubr.f32.mxu0 0.0
        %1203 = vmatmul.mubr.f32.gmra.mrb[0].mxu0 %v812
        %v1204 = vpop.f32.mrb[0].mxu0
        %v1205 = vadd.f32 0.0, %v1204
        %v1206 = vpop.f32.mrb[0].mxu0
        %1207 = vmatprep.mubr.f32.mxu0 0.0
        %1208 = vmatmul.mubr.f32.gmra.mrb[0].mxu0 %v815
        %v1209 = vpop.f32.mrb[0].mxu0
        %v1210 = vadd.f32 0.0, %v1209
        %v1211 = vpop.f32.mrb[0].mxu0
        %1212 = vmatprep.mubr.f32.mxu0 0.0
        %1213 = vmatmul.mubr.f32.gmra.mrb[0].mxu0 %v820
        %v1214 = vpop.f32.mrb[0].mxu0
        %v1215 = vadd.f32 0.0, %v1214
        %v1216 = vpop.f32.mrb[0].mxu0
        %1217 = vmatprep.mubr.f32.mxu0 0.0
        %1218 = vmatmul.mubr.f32.gmra.mrb[0].mxu0 %v823
        %v1219 = vpop.f32.mrb[0].mxu0
        %v1220 = vadd.f32 0.0, %v1219
        %v1221 = vpop.f32.mrb[0].mxu0
        %1222 = vmatprep.mubr.f32.mxu0 0.0
        %1223 = vmatmul.mubr.f32.gmra.mrb[0].mxu0 %v828
        %v1224 = vpop.f32.mrb[0].mxu0
        %v1225 = vadd.f32 0.0, %v1224
        %v1226 = vpop.f32.mrb[0].mxu0
        %1227 = vmatprep.mubr.f32.mxu0 0.0
        %1228 = vmatmul.mubr.f32.gmra.mrb[0].mxu0 %v831
        %v1229 = vpop.f32.mrb[0].mxu0
        %v1230 = vadd.f32 0.0, %v1229
        %v1231 = vpop.f32.mrb[0].mxu0
        %1232 = vmatprep.mubr.f32.mxu0 0.0
        %1233 = vmatmul.mubr.f32.gmra.mrb[0].mxu0 %v836
        %v1234 = vpop.f32.mrb[0].mxu0
        %v1235 = vadd.f32 0.0, %v1234
        %v1236 = vpop.f32.mrb[0].mxu0
        %1237 = vmatprep.mubr.f32.mxu0 0.0
        %1238 = vmatmul.mubr.f32.gmra.mrb[0].mxu0 %v839
        %v1239 = vpop.f32.mrb[0].mxu0
        %v1240 = vadd.f32 0.0, %v1239
        %v1241 = vpop.f32.mrb[0].mxu0
        %1242 = vdwg.mxu0
        %vm1243 = vcmask 15360
        %1244 = vst.msk [vmem:[%s230] sm:$0xff] %vm1243, %v925
        %1245 = vst.msk [vmem:[%s230 + $0x8] sm:$0xff] %vm1243, %v930
        %1246 = vst.msk [vmem:[%s230 + $0x10] sm:$0xff] %vm1243, %v935
        %1247 = vst.msk [vmem:[%s230 + $0x18] sm:$0xff] %vm1243, %v940
        %1248 = vst.msk [vmem:[%s230 + $0x20] sm:$0xff] %vm1243, %v945
        %1249 = vst.msk [vmem:[%s230 + $0x28] sm:$0xff] %vm1243, %v950
        %1250 = vst.msk [vmem:[%s230 + $0x30] sm:$0xff] %vm1243, %v955
        %1251 = vst.msk [vmem:[%s230 + $0x38] sm:$0xff] %vm1243, %v960
        %1252 = vst.msk [vmem:[%s230 + $0x40] sm:$0xff] %vm1243, %v965
        %1253 = vst.msk [vmem:[%s230 + $0x48] sm:$0xff] %vm1243, %v970
        %1254 = vst.msk [vmem:[%s230 + $0x50] sm:$0xff] %vm1243, %v975
        %1255 = vst.msk [vmem:[%s230 + $0x58] sm:$0xff] %vm1243, %v980
        %1256 = vst.msk [vmem:[%s230 + $0x60] sm:$0xff] %vm1243, %v985
        %1257 = vst.msk [vmem:[%s230 + $0x68] sm:$0xff] %vm1243, %v990
        %1258 = vst.msk [vmem:[%s230 + $0x70] sm:$0xff] %vm1243, %v995
        %1259 = vst.msk [vmem:[%s230 + $0x78] sm:$0xff] %vm1243, %v1000
        %1260 = vst.msk [vmem:[%s230 + $0x80] sm:$0xff] %vm1243, %v1005
        %1261 = vst.msk [vmem:[%s230 + $0x88] sm:$0xff] %vm1243, %v1010
        %1262 = vst.msk [vmem:[%s230 + $0x90] sm:$0xff] %vm1243, %v1015
        %1263 = vst.msk [vmem:[%s230 + $0x98] sm:$0xff] %vm1243, %v1020
        %1264 = vst.msk [vmem:[%s230 + $0xa0] sm:$0xff] %vm1243, %v1025
        %1265 = vst.msk [vmem:[%s230 + $0xa8] sm:$0xff] %vm1243, %v1030
        %1266 = vst.msk [vmem:[%s230 + $0xb0] sm:$0xff] %vm1243, %v1035
        %1267 = vst.msk [vmem:[%s230 + $0xb8] sm:$0xff] %vm1243, %v1040
        %1268 = vst.msk [vmem:[%s230 + $0xc0] sm:$0xff] %vm1243, %v1045
        %1269 = vst.msk [vmem:[%s230 + $0xc8] sm:$0xff] %vm1243, %v1050
        %1270 = vst.msk [vmem:[%s230 + $0xd0] sm:$0xff] %vm1243, %v1055
        %1271 = vst.msk [vmem:[%s230 + $0xd8] sm:$0xff] %vm1243, %v1060
        %1272 = vst.msk [vmem:[%s230 + $0xe0] sm:$0xff] %vm1243, %v1065
        %1273 = vst.msk [vmem:[%s230 + $0xe8] sm:$0xff] %vm1243, %v1070
        %1274 = vst.msk [vmem:[%s230 + $0xf0] sm:$0xff] %vm1243, %v1075
        %1275 = vst.msk [vmem:[%s230 + $0xf8] sm:$0xff] %vm1243, %v1080
        %1276 = vst.msk [vmem:[%s230 + $0x100] sm:$0xff] %vm1243, %v1085
        %1277 = vst.msk [vmem:[%s230 + $0x108] sm:$0xff] %vm1243, %v1090
        %1278 = vst.msk [vmem:[%s230 + $0x110] sm:$0xff] %vm1243, %v1095
        %1279 = vst.msk [vmem:[%s230 + $0x118] sm:$0xff] %vm1243, %v1100
        %1280 = vst.msk [vmem:[%s230 + $0x120] sm:$0xff] %vm1243, %v1105
        %1281 = vst.msk [vmem:[%s230 + $0x128] sm:$0xff] %vm1243, %v1110
        %1282 = vst.msk [vmem:[%s230 + $0x130] sm:$0xff] %vm1243, %v1115
        %1283 = vst.msk [vmem:[%s230 + $0x138] sm:$0xff] %vm1243, %v1120
        %1284 = vst.msk [vmem:[%s230 + $0x140] sm:$0xff] %vm1243, %v1125
        %1285 = vst.msk [vmem:[%s230 + $0x148] sm:$0xff] %vm1243, %v1130
        %1286 = vst.msk [vmem:[%s230 + $0x150] sm:$0xff] %vm1243, %v1135
        %1287 = vst.msk [vmem:[%s230 + $0x158] sm:$0xff] %vm1243, %v1140
        %1288 = vst.msk [vmem:[%s230 + $0x160] sm:$0xff] %vm1243, %v1145
        %1289 = vst.msk [vmem:[%s230 + $0x168] sm:$0xff] %vm1243, %v1150
        %1290 = vst.msk [vmem:[%s230 + $0x170] sm:$0xff] %vm1243, %v1155
        %1291 = vst.msk [vmem:[%s230 + $0x178] sm:$0xff] %vm1243, %v1160
        %1292 = vst.msk [vmem:[%s230 + $0x180] sm:$0xff] %vm1243, %v1165
        %1293 = vst.msk [vmem:[%s230 + $0x188] sm:$0xff] %vm1243, %v1170
        %1294 = vst.msk [vmem:[%s230 + $0x190] sm:$0xff] %vm1243, %v1175
        %1295 = vst.msk [vmem:[%s230 + $0x198] sm:$0xff] %vm1243, %v1180
        %1296 = vst.msk [vmem:[%s230 + $0x1a0] sm:$0xff] %vm1243, %v1185
        %1297 = vst.msk [vmem:[%s230 + $0x1a8] sm:$0xff] %vm1243, %v1190
        %1298 = vst.msk [vmem:[%s230 + $0x1b0] sm:$0xff] %vm1243, %v1195
        %1299 = vst.msk [vmem:[%s230 + $0x1b8] sm:$0xff] %vm1243, %v1200
        %1300 = vst.msk [vmem:[%s230 + $0x1c0] sm:$0xff] %vm1243, %v1205
        %1301 = vst.msk [vmem:[%s230 + $0x1c8] sm:$0xff] %vm1243, %v1210
        %1302 = vst.msk [vmem:[%s230 + $0x1d0] sm:$0xff] %vm1243, %v1215
        %1303 = vst.msk [vmem:[%s230 + $0x1d8] sm:$0xff] %vm1243, %v1220
        %1304 = vst.msk [vmem:[%s230 + $0x1e0] sm:$0xff] %vm1243, %v1225
        %1305 = vst.msk [vmem:[%s230 + $0x1e8] sm:$0xff] %vm1243, %v1230
        %1306 = vst.msk [vmem:[%s230 + $0x1f0] sm:$0xff] %vm1243, %v1235
        %1307 = vst.msk [vmem:[%s230 + $0x1f8] sm:$0xff] %vm1243, %v1240
        %v1308 = vpack.c.bf16 %v591, %v588
        %v1309 = vpack.c.bf16 %v599, %v596
        %v1310 = vpack.c.bf16 %v607, %v604
        %v1311 = vpack.c.bf16 %v615, %v612
        %v1312 = vpack.c.bf16 %v623, %v620
        %v1313 = vpack.c.bf16 %v631, %v628
        %v1314 = vpack.c.bf16 %v639, %v636
        %v1315 = vpack.c.bf16 %v647, %v644
        %v1316 = vpack.c.bf16 %v655, %v652
        %v1317 = vpack.c.bf16 %v663, %v660
        %v1318 = vpack.c.bf16 %v671, %v668
        %v1319 = vpack.c.bf16 %v679, %v676
        %v1320 = vpack.c.bf16 %v687, %v684
        %v1321 = vpack.c.bf16 %v695, %v692
        %v1322 = vpack.c.bf16 %v703, %v700
        %v1323 = vpack.c.bf16 %v711, %v708
        %v1324 = vpack.c.bf16 %v719, %v716
        %v1325 = vpack.c.bf16 %v727, %v724
        %v1326 = vpack.c.bf16 %v735, %v732
        %v1327 = vpack.c.bf16 %v743, %v740
        %v1328 = vpack.c.bf16 %v751, %v748
        %v1329 = vpack.c.bf16 %v759, %v756
        %v1330 = vpack.c.bf16 %v767, %v764
        %v1331 = vpack.c.bf16 %v775, %v772
        %v1332 = vpack.c.bf16 %v783, %v780
        %v1333 = vpack.c.bf16 %v791, %v788
        %v1334 = vpack.c.bf16 %v799, %v796
        %v1335 = vpack.c.bf16 %v807, %v804
        %v1336 = vpack.c.bf16 %v815, %v812
        %v1337 = vpack.c.bf16 %v823, %v820
        %v1338 = vpack.c.bf16 %v831, %v828
        %v1339 = vpack.c.bf16 %v839, %v836
        %v1372 = vunpack.c.l.b16 %v1308
        %v1373 = vunpack.c.h.b16 %v1308
        %v1374 = vunpack.c.l.b16 %v1309
        %v1375 = vunpack.c.h.b16 %v1309
        %v1376 = vunpack.c.l.b16 %v1310
        %v1377 = vunpack.c.h.b16 %v1310
        %v1378 = vunpack.c.l.b16 %v1311
        %v1379 = vunpack.c.h.b16 %v1311
        %v1380 = vunpack.c.l.b16 %v1312
        %v1381 = vunpack.c.h.b16 %v1312
        %v1382 = vunpack.c.l.b16 %v1313
        %v1383 = vunpack.c.h.b16 %v1313
        %v1384 = vunpack.c.l.b16 %v1314
        %v1385 = vunpack.c.h.b16 %v1314
        %v1386 = vunpack.c.l.b16 %v1315
        %v1387 = vunpack.c.h.b16 %v1315
        %v1388 = vunpack.c.l.b16 %v1316
        %v1389 = vunpack.c.h.b16 %v1316
        %v1390 = vunpack.c.l.b16 %v1317
        %v1391 = vunpack.c.h.b16 %v1317
        %v1392 = vunpack.c.l.b16 %v1318
        %v1393 = vunpack.c.h.b16 %v1318
        %v1394 = vunpack.c.l.b16 %v1319
        %v1395 = vunpack.c.h.b16 %v1319
        %v1396 = vunpack.c.l.b16 %v1320
        %v1397 = vunpack.c.h.b16 %v1320
        %v1398 = vunpack.c.l.b16 %v1321
        %v1399 = vunpack.c.h.b16 %v1321
        %v1400 = vunpack.c.l.b16 %v1322
        %v1401 = vunpack.c.h.b16 %v1322
        %v1402 = vunpack.c.l.b16 %v1323
        %v1403 = vunpack.c.h.b16 %v1323
        %v1404 = vunpack.c.l.b16 %v1324
        %v1405 = vunpack.c.h.b16 %v1324
        %v1406 = vunpack.c.l.b16 %v1325
        %v1407 = vunpack.c.h.b16 %v1325
        %v1408 = vunpack.c.l.b16 %v1326
        %v1409 = vunpack.c.h.b16 %v1326
        %v1410 = vunpack.c.l.b16 %v1327
        %v1411 = vunpack.c.h.b16 %v1327
        %v1412 = vunpack.c.l.b16 %v1328
        %v1413 = vunpack.c.h.b16 %v1328
        %v1414 = vunpack.c.l.b16 %v1329
        %v1415 = vunpack.c.h.b16 %v1329
        %v1416 = vunpack.c.l.b16 %v1330
        %v1417 = vunpack.c.h.b16 %v1330
        %v1418 = vunpack.c.l.b16 %v1331
        %v1419 = vunpack.c.h.b16 %v1331
        %v1420 = vunpack.c.l.b16 %v1332
        %v1421 = vunpack.c.h.b16 %v1332
        %v1422 = vunpack.c.l.b16 %v1333
        %v1423 = vunpack.c.h.b16 %v1333
        %v1424 = vunpack.c.l.b16 %v1334
        %v1425 = vunpack.c.h.b16 %v1334
        %v1426 = vunpack.c.l.b16 %v1335
        %v1427 = vunpack.c.h.b16 %v1335
        %v1428 = vunpack.c.l.b16 %v1336
        %v1429 = vunpack.c.h.b16 %v1336
        %v1430 = vunpack.c.l.b16 %v1337
        %v1431 = vunpack.c.h.b16 %v1337
        %v1432 = vunpack.c.l.b16 %v1338
        %v1433 = vunpack.c.h.b16 %v1338
        %v1434 = vunpack.c.l.b16 %v1339
        %v1435 = vunpack.c.h.b16 %v1339
        %v1436 = vpack.c.b16 %v1372, %v1372
        %v1437 = vpack.c.b16 %v1373, %v1373
        %v1438 = vpack.c.b16 %v1374, %v1374
        %v1439 = vpack.c.b16 %v1375, %v1375
        %v1440 = vpack.c.b16 %v1376, %v1376
        %v1441 = vpack.c.b16 %v1377, %v1377
        %v1442 = vpack.c.b16 %v1378, %v1378
        %v1443 = vpack.c.b16 %v1379, %v1379
        %v1444 = vpack.c.b16 %v1380, %v1380
        %v1445 = vpack.c.b16 %v1381, %v1381
        %v1446 = vpack.c.b16 %v1382, %v1382
        %v1447 = vpack.c.b16 %v1383, %v1383
        %v1448 = vpack.c.b16 %v1384, %v1384
        %v1449 = vpack.c.b16 %v1385, %v1385
        %v1450 = vpack.c.b16 %v1386, %v1386
        %v1451 = vpack.c.b16 %v1387, %v1387
        %v1452 = vpack.c.b16 %v1388, %v1388
        %v1453 = vpack.c.b16 %v1389, %v1389
        %v1454 = vpack.c.b16 %v1390, %v1390
        %v1455 = vpack.c.b16 %v1391, %v1391
        %v1456 = vpack.c.b16 %v1392, %v1392
        %v1457 = vpack.c.b16 %v1393, %v1393
        %v1458 = vpack.c.b16 %v1394, %v1394
        %v1459 = vpack.c.b16 %v1395, %v1395
        %v1460 = vpack.c.b16 %v1396, %v1396
        %v1461 = vpack.c.b16 %v1397, %v1397
        %v1462 = vpack.c.b16 %v1398, %v1398
        %v1463 = vpack.c.b16 %v1399, %v1399
        %v1464 = vpack.c.b16 %v1400, %v1400
        %v1465 = vpack.c.b16 %v1401, %v1401
        %v1466 = vpack.c.b16 %v1402, %v1402
        %v1467 = vpack.c.b16 %v1403, %v1403
        %v1468 = vpack.c.b16 %v1404, %v1404
        %v1469 = vpack.c.b16 %v1405, %v1405
        %v1470 = vpack.c.b16 %v1406, %v1406
        %v1471 = vpack.c.b16 %v1407, %v1407
        %v1472 = vpack.c.b16 %v1408, %v1408
        %v1473 = vpack.c.b16 %v1409, %v1409
        %v1474 = vpack.c.b16 %v1410, %v1410
        %v1475 = vpack.c.b16 %v1411, %v1411
        %v1476 = vpack.c.b16 %v1412, %v1412
        %v1477 = vpack.c.b16 %v1413, %v1413
        %v1478 = vpack.c.b16 %v1414, %v1414
        %v1479 = vpack.c.b16 %v1415, %v1415
        %v1480 = vpack.c.b16 %v1416, %v1416
        %v1481 = vpack.c.b16 %v1417, %v1417
        %v1482 = vpack.c.b16 %v1418, %v1418
        %v1483 = vpack.c.b16 %v1419, %v1419
        %v1484 = vpack.c.b16 %v1420, %v1420
        %v1485 = vpack.c.b16 %v1421, %v1421
        %v1486 = vpack.c.b16 %v1422, %v1422
        %v1487 = vpack.c.b16 %v1423, %v1423
        %v1488 = vpack.c.b16 %v1424, %v1424
        %v1489 = vpack.c.b16 %v1425, %v1425
        %v1490 = vpack.c.b16 %v1426, %v1426
        %v1491 = vpack.c.b16 %v1427, %v1427
        %v1492 = vpack.c.b16 %v1428, %v1428
        %v1493 = vpack.c.b16 %v1429, %v1429
        %v1494 = vpack.c.b16 %v1430, %v1430
        %v1495 = vpack.c.b16 %v1431, %v1431
        %v1496 = vpack.c.b16 %v1432, %v1432
        %v1497 = vpack.c.b16 %v1433, %v1433
        %v1498 = vpack.c.b16 %v1434, %v1434
        %v1499 = vpack.c.b16 %v1435, %v1435
        %1564 = vst [vmem:[%s216] sm:$0xf] %v1436
        %1565 = vst [vmem:[%s216 + $0x4] sm:$0xf] %v1437
        %1566 = vst [vmem:[%s216 + $0x8] sm:$0xf] %v1438
        %1567 = vst [vmem:[%s216 + $0xc] sm:$0xf] %v1439
        %1568 = vst [vmem:[%s216 + $0x10] sm:$0xf] %v1440
        %1569 = vst [vmem:[%s216 + $0x14] sm:$0xf] %v1441
        %1570 = vst [vmem:[%s216 + $0x18] sm:$0xf] %v1442
        %1571 = vst [vmem:[%s216 + $0x1c] sm:$0xf] %v1443
        %1572 = vst [vmem:[%s216 + $0x20] sm:$0xf] %v1444
        %1573 = vst [vmem:[%s216 + $0x24] sm:$0xf] %v1445
        %1574 = vst [vmem:[%s216 + $0x28] sm:$0xf] %v1446
        %1575 = vst [vmem:[%s216 + $0x2c] sm:$0xf] %v1447
        %1576 = vst [vmem:[%s216 + $0x30] sm:$0xf] %v1448
        %1577 = vst [vmem:[%s216 + $0x34] sm:$0xf] %v1449
        %1578 = vst [vmem:[%s216 + $0x38] sm:$0xf] %v1450
        %1579 = vst [vmem:[%s216 + $0x3c] sm:$0xf] %v1451
        %1580 = vst [vmem:[%s216 + $0x40] sm:$0xf] %v1452
        %1581 = vst [vmem:[%s216 + $0x44] sm:$0xf] %v1453
        %1582 = vst [vmem:[%s216 + $0x48] sm:$0xf] %v1454
        %1583 = vst [vmem:[%s216 + $0x4c] sm:$0xf] %v1455
        %1584 = vst [vmem:[%s216 + $0x50] sm:$0xf] %v1456
        %1585 = vst [vmem:[%s216 + $0x54] sm:$0xf] %v1457
        %1586 = vst [vmem:[%s216 + $0x58] sm:$0xf] %v1458
        %1587 = vst [vmem:[%s216 + $0x5c] sm:$0xf] %v1459
        %1588 = vst [vmem:[%s216 + $0x60] sm:$0xf] %v1460
        %1589 = vst [vmem:[%s216 + $0x64] sm:$0xf] %v1461
        %1590 = vst [vmem:[%s216 + $0x68] sm:$0xf] %v1462
        %1591 = vst [vmem:[%s216 + $0x6c] sm:$0xf] %v1463
        %1592 = vst [vmem:[%s216 + $0x70] sm:$0xf] %v1464
        %1593 = vst [vmem:[%s216 + $0x74] sm:$0xf] %v1465
        %1594 = vst [vmem:[%s216 + $0x78] sm:$0xf] %v1466
        %1595 = vst [vmem:[%s216 + $0x7c] sm:$0xf] %v1467
        %1596 = vst [vmem:[%s216 + $0x80] sm:$0xf] %v1468
        %1597 = vst [vmem:[%s216 + $0x84] sm:$0xf] %v1469
        %1598 = vst [vmem:[%s216 + $0x88] sm:$0xf] %v1470
        %1599 = vst [vmem:[%s216 + $0x8c] sm:$0xf] %v1471
        %1600 = vst [vmem:[%s216 + $0x90] sm:$0xf] %v1472
        %1601 = vst [vmem:[%s216 + $0x94] sm:$0xf] %v1473
        %1602 = vst [vmem:[%s216 + $0x98] sm:$0xf] %v1474
        %1603 = vst [vmem:[%s216 + $0x9c] sm:$0xf] %v1475
        %1604 = vst [vmem:[%s216 + $0xa0] sm:$0xf] %v1476
        %1605 = vst [vmem:[%s216 + $0xa4] sm:$0xf] %v1477
        %1606 = vst [vmem:[%s216 + $0xa8] sm:$0xf] %v1478
        %1607 = vst [vmem:[%s216 + $0xac] sm:$0xf] %v1479
        %1608 = vst [vmem:[%s216 + $0xb0] sm:$0xf] %v1480
        %1609 = vst [vmem:[%s216 + $0xb4] sm:$0xf] %v1481
        %1610 = vst [vmem:[%s216 + $0xb8] sm:$0xf] %v1482
        %1611 = vst [vmem:[%s216 + $0xbc] sm:$0xf] %v1483
        %1612 = vst [vmem:[%s216 + $0xc0] sm:$0xf] %v1484
        %1613 = vst [vmem:[%s216 + $0xc4] sm:$0xf] %v1485
        %1614 = vst [vmem:[%s216 + $0xc8] sm:$0xf] %v1486
        %1615 = vst [vmem:[%s216 + $0xcc] sm:$0xf] %v1487
        %1616 = vst [vmem:[%s216 + $0xd0] sm:$0xf] %v1488
        %1617 = vst [vmem:[%s216 + $0xd4] sm:$0xf] %v1489
        %1618 = vst [vmem:[%s216 + $0xd8] sm:$0xf] %v1490
        %1619 = vst [vmem:[%s216 + $0xdc] sm:$0xf] %v1491
        %1620 = vst [vmem:[%s216 + $0xe0] sm:$0xf] %v1492
        %1621 = vst [vmem:[%s216 + $0xe4] sm:$0xf] %v1493
        %1622 = vst [vmem:[%s216 + $0xe8] sm:$0xf] %v1494
        %1623 = vst [vmem:[%s216 + $0xec] sm:$0xf] %v1495
        %1624 = vst [vmem:[%s216 + $0xf0] sm:$0xf] %v1496
        %1625 = vst [vmem:[%s216 + $0xf4] sm:$0xf] %v1497
        %1626 = vst [vmem:[%s216 + $0xf8] sm:$0xf] %v1498
        %1627 = vst [vmem:[%s216 + $0xfc] sm:$0xf] %v1499
        %s1628 = sand.u32 %s98, 1
        %s1629 = scalar_lea.sflag [#allocation4], %s1628
        %s1630 = sand.u32 %s98, 1
        %s1631 = smul.addr %s1630, 256
        %s1632 = scalar_lea.vmem [#allocation5], %s1631
        %s1633 = smul.u32 64, %s22
        %p1634 = scmp.lt.s32.totalorder %s1633, 255
        %s1635 = scalar_select %p1634, %s1633, 255
        %s1636 = smul.addr %s1635, 8
        %s1637 = scalar_lea.vmem %s4, %s1636
        // Predicated region
        $region37: #{tpu_custom_call.1} parent=31 // pred_check
          %p1638 = pneg %p108
        $region38: #{tpu_custom_call.1} parent=31 // pred_check_branch
          %1640 = sbr.rel (%p1638) target = $region40
        $region39: #{tpu_custom_call.1} parent=31 // pred_region
          %s1641 = smul.u32 64, %s22
          %s1643 = ssub.s32 4096, 4096
          %1644 = vsyncadd %s1629, %s1643
          %s1645 = smul.addr %s1641, 64
          %s1646 = scalar_lea.hbm %s3, %s1645
          %s1647 = sshll.u32 %s1632, 4
          %s1648 = int_to_ptr.vmem [resolvable:$true] %s1647
          %1653 = dma.vmem_to_hbm [thread:$0]  %s1648, 4096, %s1646, %s1629, 64, 64, 4
        $region40: #{tpu_custom_call.1} parent=31 // pred_fallthru
          _
        // Predicated region
        $region41: #{tpu_custom_call.1} parent=31 // pred_check
          %p1654 = pneg %p134
        $region42: #{tpu_custom_call.1} parent=31 // pred_check_branch
          %1656 = sbr.rel (%p1654) target = $region44
        $region43: #{tpu_custom_call.1} parent=31 // pred_region
          %s1657 = smul.u32 64, %s22
        $region44: #{tpu_custom_call.1} parent=31 // pred_fallthru
          _
      $region32: #{tpu_custom_call.1} parent=5 // pred_fallthru
        _
      %p1658 = scmp.le.s32.totalorder 2, %s17
      // Predicated region
      $region45: #{tpu_custom_call.1} parent=5 // pred_check
        %p1659 = pneg %p1658
      $region46: #{tpu_custom_call.1} parent=5 // pred_check_branch
        %1661 = sbr.rel (%p1659) target = $region48
      $region47: #{tpu_custom_call.1} parent=5 // pred_region
        %s1662 = ssub.s32 %s17, 2
        // Predicated region
        $region49: #{tpu_custom_call.1} parent=47 // pred_check
          %p1663 = pneg %p114
        $region50: #{tpu_custom_call.1} parent=47 // pred_check_branch
          %1665 = sbr.rel (%p1663) target = $region52
        $region51: #{tpu_custom_call.1} parent=47 // pred_region
          %s1666 = sand.u32 %s99, 1
          %s1667 = scalar_lea.sflag [#allocation4], %s1666
          %s1668 = sand.u32 %s99, 1
          %s1669 = smul.addr %s1668, 256
          %s1670 = scalar_lea.vmem [#allocation5], %s1669
          %1671 = dma.done %s1667, 4096
        $region52: #{tpu_custom_call.1} parent=47 // pred_fallthru
          _
        // Predicated region
        $region53: #{tpu_custom_call.1} parent=47 // pred_check
          %p1672 = pneg %p140
        $region54: #{tpu_custom_call.1} parent=47 // pred_check_branch
          %1674 = sbr.rel (%p1672) target = $region56
        $region55: #{tpu_custom_call.1} parent=47 // pred_region
          %s1675 = smul.u32 64, %s23
          %p1676 = scmp.lt.s32.totalorder %s1675, 255
          %s1677 = scalar_select %p1676, %s1675, 255
          %s1678 = smul.addr %s1677, 8
          %s1679 = scalar_lea.vmem %s4, %s1678
        $region56: #{tpu_custom_call.1} parent=47 // pred_fallthru
          _
      $region48: #{tpu_custom_call.1} parent=5 // pred_fallthru
        _
    $region6: #{tpu_custom_call.1} parent=1 // loop_footer
      %s21 = sadd.s32 1, %s17
    $region7: #{tpu_custom_call.1} parent=1 // loop_footer_branch
      %16 = sbr.rel target = $region3
    $region8: #{tpu_custom_call.1} parent=1 // loop_exit
      _
    %1680 = vsyncpa [#allocation3], 1
    %s1681 = scalar_lea.sflag [#allocation3], 1
    %1682 = vsyncpa %s1681, 1
    %1683 = vsyncpa [#allocation4], 1
    %s1684 = scalar_lea.sflag [#allocation4], 1
    %1685 = vsyncpa %s1684, 1

</llo_original>
